<compile_context>
chip_gen: v5e
topology: v5e:2x2
jax: 0.10.0
libtpu: 0.0.40
codegen_flags: <defaults>
</compile_context>

<pallas_src>
import jax
import jax.numpy as jnp
import numpy as np
from jax.experimental import pallas as pl
from jax.experimental.pallas import tpu as pltpu

C_IN = 32          # n_features fed to OSGDecoder
HIDDEN = 64        # OSGDecoder.hidden_dim
C_OUT = 1 + 32     # 1 + decoder_output_dim
TM_MAX = 2048      # rows per grid step (sweep 512..4096; ~1.5 MiB live VMEM)
_ROW_ALIGN = 256   # keeps (sublane, lane) tiling valid for f32 and bf16 blocks


def _round_up(x, m):
    return ((x + m - 1) // m) * m


# ----------------------------------------------------------------------------
# Pallas kernel: OSGDecoder forward for one tile of rows.
# ----------------------------------------------------------------------------
def _osg_decoder_kernel(feat_ref, w1_ref, b1_ref, w2_ref, b2_ref, out_ref):
    # feat_ref: (3, TM, C_IN)  bf16     w1_ref: (C_IN, HIDDEN) bf16 (pre /3)
    # b1_ref:   (1, HIDDEN)    f32      w2_ref: (HIDDEN, C_OUT) f32
    # b2_ref:   (1, C_OUT)     f32      out_ref: (TM, C_OUT)    f32
    w1 = w1_ref[...]

    # Mean over the 3 planes folded into the contraction (w1 carries the 1/3);
    # three bf16 MXU dots accumulated in f32.
    h = jnp.dot(feat_ref[0], w1, preferred_element_type=jnp.float32)
    h = h + jnp.dot(feat_ref[1], w1, preferred_element_type=jnp.float32)
    h = h + jnp.dot(feat_ref[2], w1, preferred_element_type=jnp.float32)
    h = h + b1_ref[...]
    h = jnp.logaddexp(h, 0.0)          # Softplus, f32 (v5e has no bf16 EUP)

    # Second FC layer entirely in f32 so the unbounded sigma pre-activation
    # keeps full accumulation precision.
    y = jnp.dot(h, w2_ref[...], preferred_element_type=jnp.float32) + b2_ref[...]

    # Channel 0 = raw sigma; channels 1..32 = sigmoid(y)*(1+2e-3)-1e-3.
    # Apply the activation full-width and select, to avoid lane concat/offset
    # stores (one extra sigmoid column is free; the EUP has slack).
    act = jax.nn.sigmoid(y) * (1.0 + 2.0 * 0.001) - 0.001
    col = jax.lax.broadcasted_iota(jnp.int32, y.shape, 1)
    out_ref[...] = jnp.where(col == 0, y, act)


@jax.jit
def osg_decoder_pallas(sampled_features, w1, b1, w2, b2):
    """OSGDecoder.forward.

    sampled_features: (N, 3, M, C_IN) float  (tri-plane samples)
    returns dict with rgb: (N, M, 32), sigma: (N, M, 1)
    """
    N, P, M, C = sampled_features.shape
    assert P == 3 and C == C_IN

    # bf16 features/w1 halve HBM traffic for this memory-bound kernel; all
    # accumulation, biases and transcendentals stay f32 inside the kernel.
    feat = sampled_features.astype(jnp.bfloat16)
    w1_scaled = (w1.astype(jnp.float32) * (1.0 / 3.0)).astype(jnp.bfloat16)
    b1 = b1.astype(jnp.float32)
    w2 = w2.astype(jnp.float32)
    b2 = b2.astype(jnp.float32)

    tm = min(TM_MAX, _round_up(M, _ROW_ALIGN))
    m_pad = _round_up(M, tm)
    if m_pad != M:
        feat = jnp.pad(feat, ((0, 0), (0, 0), (0, m_pad - M), (0, 0)))

    grid = (N, m_pad // tm)

    out = pl.pallas_call(
        _osg_decoder_kernel,
        out_shape=jax.ShapeDtypeStruct((N, m_pad, C_OUT), jnp.float32),
        grid_spec=pltpu.PrefetchScalarGridSpec(
            num_scalar_prefetch=0,
            grid=grid,
            in_specs=[
                # batch dim squeezed; rows tiled; channels full-width.
                pl.BlockSpec((None, 3, tm, C_IN), lambda n, i: (n, 0, i, 0)),
                # constant block index -> fetched once, buffer reused.
                pl.BlockSpec((C_IN, HIDDEN), lambda n, i: (0, 0)),
                pl.BlockSpec((1, HIDDEN), lambda n, i: (0, 0)),
                pl.BlockSpec((HIDDEN, C_OUT), lambda n, i: (0, 0)),
                pl.BlockSpec((1, C_OUT), lambda n, i: (0, 0)),
            ],
            out_specs=pl.BlockSpec((None, tm, C_OUT), lambda n, i: (n, i, 0)),
        ),
        compiler_params=pltpu.CompilerParams(
            dimension_semantics=("parallel", "parallel")),
    )(feat, w1_scaled, b1, w2, b2)

    if m_pad != M:
        out = out[:, :M]
    return {"rgb": out[..., 1:], "sigma": out[..., 0:1]}


# ----------------------------------------------------------------------------
# Parameter construction (mirrors FullyConnectedLayer.__init__: weight =
# randn(out, in) / lr_mul, bias = 0; at forward time weight * lr_mul/sqrt(in),
# bias * lr_mul.  Gains folded in since lr_mul = decoder_lr_mul = 1.
# ----------------------------------------------------------------------------
def make_decoder_params(key):
    k1, k2 = jax.random.split(key)
    lr_mul = 1.0
    w1_raw = jax.random.normal(k1, (HIDDEN, C_IN), jnp.float32) / lr_mul
    w2_raw = jax.random.normal(k2, (C_OUT, HIDDEN), jnp.float32) / lr_mul
    w1 = (w1_raw * (lr_mul / np.sqrt(C_IN))).T          # (C_IN, HIDDEN)
    w2 = (w2_raw * (lr_mul / np.sqrt(HIDDEN))).T        # (HIDDEN, C_OUT)
    b1 = jnp.zeros((1, HIDDEN), jnp.float32) * lr_mul
    b2 = jnp.zeros((1, C_OUT), jnp.float32) * lr_mul
    return w1, b1, w2, b2


# Pure-JAX reference of OSGDecoder.forward for verification.
def osg_decoder_ref(sampled_features, w1, b1, w2, b2):
    x = jnp.mean(sampled_features, axis=1)               # (N, M, C)
    N, M, C = x.shape
    x = x.reshape(N * M, C)
    h = jax.nn.softplus(x @ w1 + b1)
    y = (h @ w2 + b2).reshape(N, M, -1)
    rgb = jax.nn.sigmoid(y[..., 1:]) * (1 + 2 * 0.001) - 0.001
    sigma = y[..., 0:1]
    return {"rgb": rgb, "sigma": sigma}


class Img2TriPlaneGeneratorPallas:
    """Partial JAX/Pallas port of Img2TriPlaneGenerator.

    Only the OSGDecoder (decoder of sampled tri-plane features, the per-ray-
    sample hot path) is implemented; other submodules are not defined in the
    reference source.
    """

    def __init__(self, key):
        self.decoder_params = make_decoder_params(key)
        # TODO(synk): img2plane_backbone (Img2PlaneModel) not provided.
        # TODO(synk): renderer (ImportanceRenderer) / ray_sampler not provided.
        # TODO(synk): superresolution (SuperresolutionHybrid8XDC) not provided.

    def decode(self, sampled_features):
        return osg_decoder_pallas(sampled_features, *self.decoder_params)


def _check_case(model, sampled_features):
    w1, b1, w2, b2 = model.decoder_params

    out = model.decode(sampled_features)
    jax.block_until_ready(out)

    # (a) full-f32 reference (checks end-to-end semantics; bf16 inputs -> loose tol)
    ref = osg_decoder_ref(sampled_features, w1, b1, w2, b2)
    np.testing.assert_allclose(np.asarray(out["sigma"]), np.asarray(ref["sigma"]),
                               rtol=3e-2, atol=3e-2)
    np.testing.assert_allclose(np.asarray(out["rgb"]), np.asarray(ref["rgb"]),
                               rtol=3e-2, atol=3e-2)

    # (b) precision-matched reference (checks kernel fidelity at tight tolerance)
    feat_q = sampled_features.astype(jnp.bfloat16).astype(jnp.float32)
    w1_q = (w1 * (1.0 / 3.0)).astype(jnp.bfloat16).astype(jnp.float32) * 3.0
    ref_q = osg_decoder_ref(feat_q, w1_q, b1, w2, b2)
    np.testing.assert_allclose(np.asarray(out["sigma"]), np.asarray(ref_q["sigma"]),
                               rtol=1e-3, atol=1e-3)
    np.testing.assert_allclose(np.asarray(out["rgb"]), np.asarray(ref_q["rgb"]),
                               rtol=1e-3, atol=1e-3)

    N, _, M, _ = sampled_features.shape
    assert out["rgb"].shape == (N, M, 32) and out["sigma"].shape == (N, M, 1)


if __name__ == "__main__":
    key = jax.random.PRNGKey(0)
    k_param, k_feat1, k_feat2 = jax.random.split(key, 3)

    model = Img2TriPlaneGeneratorPallas(k_param)

    # Case 1: N=2 batches, 3 planes, M=256 ray samples, 32 tri-plane channels
    # (what ImportanceRenderer hands the decoder); exact multiple of the tile.
    feats1 = jax.random.normal(k_feat1, (2, 3, 256, C_IN), jnp.float32)
    _check_case(model, feats1)

    # Case 2: non-aligned M exercises the padded-rows / masked-tail path.
    feats2 = jax.random.normal(k_feat2, (1, 3, 600, C_IN), jnp.float32)
    _check_case(model, feats2)

    print("KERNEL_OK")
</pallas_src>

<mosaic_0001>
module attributes {stable_mosaic.version = 11 : i64} {
  func.func @_osg_decoder_kernel(%arg0: i32, %arg1: i32, %arg2: memref<1x3x256x32xbf16, #tpu.memory_space<vmem>>, %arg3: memref<32x64xbf16, #tpu.memory_space<vmem>>, %arg4: memref<1x64xf32, #tpu.memory_space<vmem>>, %arg5: memref<64x33xf32, #tpu.memory_space<vmem>>, %arg6: memref<1x33xf32, #tpu.memory_space<vmem>>, %arg7: memref<1x256x33xf32, #tpu.memory_space<vmem>>) attributes {dimension_semantics = [#tpu.dimension_semantics<parallel>, #tpu.dimension_semantics<parallel>], iteration_bounds = array<i64: 2, 1>, scalar_prefetch = 0 : i64, scratch_operands = 0 : i64, tpu.core_type = #tpu.core_type<tc>, window_params = [{transform_indices = @transform_0, window_bounds = array<i64: 1, 3, 256, 32>}, {pipeline_mode = #tpu.pipeline_mode<synchronous>, transform_indices = @transform_1, window_bounds = array<i64: 32, 64>}, {pipeline_mode = #tpu.pipeline_mode<synchronous>, transform_indices = @transform_2, window_bounds = array<i64: 1, 64>}, {pipeline_mode = #tpu.pipeline_mode<synchronous>, transform_indices = @transform_3, window_bounds = array<i64: 64, 33>}, {pipeline_mode = #tpu.pipeline_mode<synchronous>, transform_indices = @transform_4, window_bounds = array<i64: 1, 33>}, {transform_indices = @transform_5, window_bounds = array<i64: 1, 256, 33>}]} {
    %c0 = arith.constant 0 : index
    %c0_0 = arith.constant 0 : index
    %0 = vector.load %arg3[%c0, %c0_0] : memref<32x64xbf16, #tpu.memory_space<vmem>>, vector<32x64xbf16>
    %c0_1 = arith.constant 0 : index
    %c0_2 = arith.constant 0 : index
    %c0_3 = arith.constant 0 : index
    %c0_4 = arith.constant 0 : index
    %1 = vector.load %arg2[%c0_1, %c0_2, %c0_3, %c0_4] : memref<1x3x256x32xbf16, #tpu.memory_space<vmem>>, vector<1x1x256x32xbf16>
    %2 = vector.shape_cast %1 : vector<1x1x256x32xbf16> to vector<256x32xbf16>
    %cst = arith.constant dense<0.000000e+00> : vector<256x64xf32>
    %3 = tpu.matmul %2, %0, %cst {dimension_numbers = #tpu.dot_dimension_numbers<[1], [0], [0], [1], [0, 0, 1, 1], [], []>} : vector<256x32xbf16>, vector<32x64xbf16>, vector<256x64xf32> -> vector<256x64xf32>
    %c0_5 = arith.constant 0 : index
    %c1 = arith.constant 1 : index
    %c0_6 = arith.constant 0 : index
    %c0_7 = arith.constant 0 : index
    %4 = vector.load %arg2[%c0_5, %c1, %c0_6, %c0_7] : memref<1x3x256x32xbf16, #tpu.memory_space<vmem>>, vector<1x1x256x32xbf16>
    %5 = vector.shape_cast %4 : vector<1x1x256x32xbf16> to vector<256x32xbf16>
    %cst_8 = arith.constant dense<0.000000e+00> : vector<256x64xf32>
    %6 = tpu.matmul %5, %0, %cst_8 {dimension_numbers = #tpu.dot_dimension_numbers<[1], [0], [0], [1], [0, 0, 1, 1], [], []>} : vector<256x32xbf16>, vector<32x64xbf16>, vector<256x64xf32> -> vector<256x64xf32>
    %7 = arith.addf %3, %6 : vector<256x64xf32>
    %c0_9 = arith.constant 0 : index
    %c2 = arith.constant 2 : index
    %c0_10 = arith.constant 0 : index
    %c0_11 = arith.constant 0 : index
    %8 = vector.load %arg2[%c0_9, %c2, %c0_10, %c0_11] : memref<1x3x256x32xbf16, #tpu.memory_space<vmem>>, vector<1x1x256x32xbf16>
    %9 = vector.shape_cast %8 : vector<1x1x256x32xbf16> to vector<256x32xbf16>
    %cst_12 = arith.constant dense<0.000000e+00> : vector<256x64xf32>
    %10 = tpu.matmul %9, %0, %cst_12 {dimension_numbers = #tpu.dot_dimension_numbers<[1], [0], [0], [1], [0, 0, 1, 1], [], []>} : vector<256x32xbf16>, vector<32x64xbf16>, vector<256x64xf32> -> vector<256x64xf32>
    %11 = arith.addf %7, %10 : vector<256x64xf32>
    %c0_13 = arith.constant 0 : index
    %c0_14 = arith.constant 0 : index
    %12 = vector.load %arg4[%c0_13, %c0_14] : memref<1x64xf32, #tpu.memory_space<vmem>>, vector<1x64xf32>
    %13 = vector.broadcast %12 : vector<1x64xf32> to vector<256x64xf32>
    %14 = arith.addf %11, %13 : vector<256x64xf32>
    %cst_15 = arith.constant 0.000000e+00 : f32
    %15 = vector.broadcast %cst_15 : f32 to vector<256x64xf32>
    %16 = arith.maximumf %14, %15 : vector<256x64xf32>
    %17 = vector.broadcast %cst_15 : f32 to vector<256x64xf32>
    %18 = arith.subf %14, %17 : vector<256x64xf32>
    %19 = arith.cmpf one, %18, %18 : vector<256x64xf32>
    %20 = vector.broadcast %cst_15 : f32 to vector<256x64xf32>
    %21 = arith.addf %14, %20 : vector<256x64xf32>
    %22 = math.absf %18 : vector<256x64xf32>
    %cst_16 = arith.constant 0.000000e+00 : f32
    %23 = vector.broadcast %cst_16 : f32 to vector<256x64xf32>
    %24 = arith.subf %23, %22 : vector<256x64xf32>
    %25 = math.exp %24 : vector<256x64xf32>
    %26 = math.log1p %25 : vector<256x64xf32>
    %27 = arith.addf %16, %26 : vector<256x64xf32>
    %28 = arith.select %19, %21, %27 : vector<256x64xi1>, vector<256x64xf32>
    %c0_17 = arith.constant 0 : index
    %c0_18 = arith.constant 0 : index
    %29 = vector.load %arg5[%c0_17, %c0_18] : memref<64x33xf32, #tpu.memory_space<vmem>>, vector<64x33xf32>
    %cst_19 = arith.constant dense<0.000000e+00> : vector<256x33xf32>
    %30 = tpu.matmul %28, %29, %cst_19 {dimension_numbers = #tpu.dot_dimension_numbers<[1], [0], [0], [1], [0, 0, 1, 1], [], []>} : vector<256x64xf32>, vector<64x33xf32>, vector<256x33xf32> -> vector<256x33xf32>
    %c0_20 = arith.constant 0 : index
    %c0_21 = arith.constant 0 : index
    %31 = vector.load %arg6[%c0_20, %c0_21] : memref<1x33xf32, #tpu.memory_space<vmem>>, vector<1x33xf32>
    %32 = vector.broadcast %31 : vector<1x33xf32> to vector<256x33xf32>
    %33 = arith.addf %30, %32 : vector<256x33xf32>
    %34 = arith.negf %33 : vector<256x33xf32>
    %35 = math.exp %34 : vector<256x33xf32>
    %cst_22 = arith.constant 1.000000e+00 : f32
    %36 = vector.broadcast %cst_22 : f32 to vector<256x33xf32>
    %37 = arith.addf %36, %35 : vector<256x33xf32>
    %38 = arith.divf %36, %37 : vector<256x33xf32>
    %cst_23 = arith.constant 1.002000e+00 : f32
    %39 = vector.broadcast %cst_23 : f32 to vector<256x33xf32>
    %40 = arith.mulf %38, %39 : vector<256x33xf32>
    %cst_24 = arith.constant 1.000000e-03 : f32
    %41 = vector.broadcast %cst_24 : f32 to vector<256x33xf32>
    %42 = arith.subf %40, %41 : vector<256x33xf32>
    %43 = tpu.iota {dimensions = array<i32: 1>} : vector<256x33xi32>
    %c0_i32 = arith.constant 0 : i32
    %44 = vector.broadcast %c0_i32 : i32 to vector<256x33xi32>
    %45 = arith.cmpi eq, %43, %44 : vector<256x33xi32>
    %46 = arith.select %45, %33, %42 : vector<256x33xi1>, vector<256x33xf32>
    %c0_25 = arith.constant 0 : index
    %c0_26 = arith.constant 0 : index
    %c0_27 = arith.constant 0 : index
    %47 = vector.load %arg7[%c0_25, %c0_26, %c0_27] : memref<1x256x33xf32, #tpu.memory_space<vmem>>, vector<1x256x33xf32>
    %48 = vector.shape_cast %47 : vector<1x256x33xf32> to vector<256x33xf32>
    %49 = vector.shape_cast %46 : vector<256x33xf32> to vector<1x256x33xf32>
    tpu.vector_store %arg7[%c0_25, %c0_26, %c0_27], %49 {strides = array<i32>} : memref<1x256x33xf32, #tpu.memory_space<vmem>>, vector<1x256x33xf32>,
    return
  }
  func.func @transform_0(%arg0: i32, %arg1: i32) -> (i32, i32, i32, i32) {
    %c0_i32 = arith.constant 0 : i32
    %c0_i32_0 = arith.constant 0 : i32
    %c0_i32_1 = arith.constant 0 : i32
    return %arg0, %c0_i32, %arg1, %c0_i32_0 : i32, i32, i32, i32
  }
  func.func @transform_1(%arg0: i32, %arg1: i32) -> (i32, i32) {
    %c0_i32 = arith.constant 0 : i32
    %c0_i32_0 = arith.constant 0 : i32
    %c0_i32_1 = arith.constant 0 : i32
    return %c0_i32, %c0_i32_0 : i32, i32
  }
  func.func @transform_2(%arg0: i32, %arg1: i32) -> (i32, i32) {
    %c0_i32 = arith.constant 0 : i32
    %c0_i32_0 = arith.constant 0 : i32
    %c0_i32_1 = arith.constant 0 : i32
    return %c0_i32, %c0_i32_0 : i32, i32
  }
  func.func @transform_3(%arg0: i32, %arg1: i32) -> (i32, i32) {
    %c0_i32 = arith.constant 0 : i32
    %c0_i32_0 = arith.constant 0 : i32
    %c0_i32_1 = arith.constant 0 : i32
    return %c0_i32, %c0_i32_0 : i32, i32
  }
  func.func @transform_4(%arg0: i32, %arg1: i32) -> (i32, i32) {
    %c0_i32 = arith.constant 0 : i32
    %c0_i32_0 = arith.constant 0 : i32
    %c0_i32_1 = arith.constant 0 : i32
    return %c0_i32, %c0_i32_0 : i32, i32
  }
  func.func @transform_5(%arg0: i32, %arg1: i32) -> (i32, i32, i32) {
    %c0_i32 = arith.constant 0 : i32
    %c0_i32_0 = arith.constant 0 : i32
    return %arg0, %arg1, %c0_i32 : i32, i32, i32
  }
}

</mosaic_0001>

<llo_original>
// kernel: osg_decoder_pallas.1
$region0: #{osg_decoder_pallas.1}
  #allocation0 [shape = 'u32[]', space=smem, size = 0x4, offset = 0x4, fixed_abs, tag = 'smem constant byte address 0x4 - core index']
  #allocation1 [shape = 'u32[72,128]{1,0:T(1,128)}', space=vmem, size = 0x9000, scoped, tag = 'internal scratch']
  %s0 = inlined_call_operand.vmem [shape: bf16[2,3,256,32], index: 0, kind: input, shape index: {}]
  %s1 = inlined_call_operand.vmem [shape: bf16[32,64], index: 1, kind: input, shape index: {}]
  %s2 = inlined_call_operand.vmem [shape: f32[1,64], index: 2, kind: input, shape index: {}]
  %s3 = inlined_call_operand.vmem [shape: f32[64,33], index: 3, kind: input, shape index: {}]
  %s4 = inlined_call_operand.vmem [shape: f32[1,33], index: 4, kind: input, shape index: {}]
  %s5 = inlined_call_operand.vmem [shape: f32[2,256,33], index: 5, kind: output, shape index: {}]
  %s6 = sld [smem:[#allocation0]]
  $region53: #{osg_decoder_pallas.1} parent=0
    _
  %s8 = ssub.s32 1, %s6
  %s9 = scalar_select 0, %s8, %s6
  loop: start=0, step=1, limit=4
  $region2: #{osg_decoder_pallas.1} parent=0 // loop_pre_header
    _
  $region3: #{osg_decoder_pallas.1} parent=0 // loop_header
    %s11 = sphi 0, %s15
    %p12 = scmp.ge.s32.totalorder %s11, 4
    %s18 = sphi 0, %s30
    %s19 = sphi 0, %s26
    %s20 = sphi 0, %s18
    %s21 = sphi 0, %s19
    %s22 = sphi 0, %s20
    %s23 = sphi 0, %s21
    %s35 = sphi 0, %s37
    %s38 = sphi 0, %s35
    %s39 = sphi 0, %s38
    %s55 = sphi 0, %s39
    %s59 = sphi 0, %s59
    %s61 = sphi 0, %s59
    %s62 = sphi 0, %s61
    %s76 = sphi 0, %s62
    %s80 = sphi 0, %s80
    %s82 = sphi 0, %s80
    %s83 = sphi 0, %s82
    %s97 = sphi 0, %s83
    %s101 = sphi 0, %s101
    %s103 = sphi 0, %s101
    %s104 = sphi 0, %s103
    %s118 = sphi 0, %s104
    %s122 = sphi 0, %s122
    %s124 = sphi 0, %s122
    %s125 = sphi 0, %s124
    %s139 = sphi 0, %s125
    %s147 = sphi 0, %s149
    %s150 = sphi 0, %s147
    %s151 = sphi 0, %s150
    %s167 = sphi 0, %s151
  $region4: #{osg_decoder_pallas.1} parent=0 // loop_header_branch
    %14 = sbr.rel (%p12) target = $region8
  $region5: #{osg_decoder_pallas.1} parent=0 // loop_body
    %s16 = ssub.s32 %s11, 1
    %s17 = ssub.s32 %s11, 2
    %s24 = sadd.s32 1, %s19
    %p25 = scmp.ge.s32.totalorder %s24, 1
    %s26 = scalar_select %p25, 0, %s24
    %s27 = sadd.s32 1, %s18
    %s28 = scalar_select %p25, %s27, %s18
    %p29 = scmp.ge.s32.totalorder %s28, 2
    %s30 = scalar_select %p29, 0, %s28
    %s31 = ssub.s32 %s18, %s30
    %s32 = ssub.s32 %s19, %s26
    %s33 = sor.u32 %s31, %s32
    %p34 = scmp.eq.s32.totalorder %s33, 0
    %s36 = sadd.s32 %s35, 1
    %s37 = scalar_select %p34, %s35, %s36
    %p40 = pneg %p34
    %p41 = scmp.eq.s32.totalorder %s11, 1
    %p42 = por %p40, %p41
    %p43 = scmp.ne.s32.totalorder %s35, %s38
    %p44 = scmp.eq.s32.totalorder %s11, 0
    %p45 = por %p43, %p44
    %p46 = scmp.ne.s32.totalorder %s35, %s38
    %p47 = scmp.eq.s32.totalorder %s16, 1
    %p48 = por %p46, %p47
    %p49 = scmp.ne.s32.totalorder %s38, %s39
    %p50 = scmp.eq.s32.totalorder %s16, 0
    %p51 = por %p49, %p50
    %p52 = scmp.ne.s32.totalorder %s38, %s39
    %p53 = scmp.eq.s32.totalorder %s17, 1
    %p54 = por %p52, %p53
    %p56 = scmp.ne.s32.totalorder %s39, %s55
    %p57 = scmp.eq.s32.totalorder %s17, 0
    %p58 = por %p56, %p57
    %s60 = sadd.s32 %s59, 1
    %p63 = scmp.eq.s32.totalorder %s11, 1
    %p64 = scmp.ne.s32.totalorder %s59, %s61
    %p65 = scmp.eq.s32.totalorder %s11, 0
    %p66 = por %p64, %p65
    %p67 = scmp.ne.s32.totalorder %s59, %s61
    %p68 = scmp.eq.s32.totalorder %s16, 1
    %p69 = por %p67, %p68
    %p70 = scmp.ne.s32.totalorder %s61, %s62
    %p71 = scmp.eq.s32.totalorder %s16, 0
    %p72 = por %p70, %p71
    %p73 = scmp.ne.s32.totalorder %s61, %s62
    %p74 = scmp.eq.s32.totalorder %s17, 1
    %p75 = por %p73, %p74
    %p77 = scmp.ne.s32.totalorder %s62, %s76
    %p78 = scmp.eq.s32.totalorder %s17, 0
    %p79 = por %p77, %p78
    %s81 = sadd.s32 %s80, 1
    %p84 = scmp.eq.s32.totalorder %s11, 1
    %p85 = scmp.ne.s32.totalorder %s80, %s82
    %p86 = scmp.eq.s32.totalorder %s11, 0
    %p87 = por %p85, %p86
    %p88 = scmp.ne.s32.totalorder %s80, %s82
    %p89 = scmp.eq.s32.totalorder %s16, 1
    %p90 = por %p88, %p89
    %p91 = scmp.ne.s32.totalorder %s82, %s83
    %p92 = scmp.eq.s32.totalorder %s16, 0
    %p93 = por %p91, %p92
    %p94 = scmp.ne.s32.totalorder %s82, %s83
    %p95 = scmp.eq.s32.totalorder %s17, 1
    %p96 = por %p94, %p95
    %p98 = scmp.ne.s32.totalorder %s83, %s97
    %p99 = scmp.eq.s32.totalorder %s17, 0
    %p100 = por %p98, %p99
    %s102 = sadd.s32 %s101, 1
    %p105 = scmp.eq.s32.totalorder %s11, 1
    %p106 = scmp.ne.s32.totalorder %s101, %s103
    %p107 = scmp.eq.s32.totalorder %s11, 0
    %p108 = por %p106, %p107
    %p109 = scmp.ne.s32.totalorder %s101, %s103
    %p110 = scmp.eq.s32.totalorder %s16, 1
    %p111 = por %p109, %p110
    %p112 = scmp.ne.s32.totalorder %s103, %s104
    %p113 = scmp.eq.s32.totalorder %s16, 0
    %p114 = por %p112, %p113
    %p115 = scmp.ne.s32.totalorder %s103, %s104
    %p116 = scmp.eq.s32.totalorder %s17, 1
    %p117 = por %p115, %p116
    %p119 = scmp.ne.s32.totalorder %s104, %s118
    %p120 = scmp.eq.s32.totalorder %s17, 0
    %p121 = por %p119, %p120
    %s123 = sadd.s32 %s122, 1
    %p126 = scmp.eq.s32.totalorder %s11, 1
    %p127 = scmp.ne.s32.totalorder %s122, %s124
    %p128 = scmp.eq.s32.totalorder %s11, 0
    %p129 = por %p127, %p128
    %p130 = scmp.ne.s32.totalorder %s122, %s124
    %p131 = scmp.eq.s32.totalorder %s16, 1
    %p132 = por %p130, %p131
    %p133 = scmp.ne.s32.totalorder %s124, %s125
    %p134 = scmp.eq.s32.totalorder %s16, 0
    %p135 = por %p133, %p134
    %p136 = scmp.ne.s32.totalorder %s124, %s125
    %p137 = scmp.eq.s32.totalorder %s17, 1
    %p138 = por %p136, %p137
    %p140 = scmp.ne.s32.totalorder %s125, %s139
    %p141 = scmp.eq.s32.totalorder %s17, 0
    %p142 = por %p140, %p141
    %s143 = ssub.s32 %s18, %s30
    %s144 = ssub.s32 %s19, %s26
    %s145 = sor.u32 %s143, %s144
    %p146 = scmp.eq.s32.totalorder %s145, 0
    %s148 = sadd.s32 %s147, 1
    %s149 = scalar_select %p146, %s147, %s148
    %p152 = pneg %p146
    %p153 = scmp.eq.s32.totalorder %s11, 1
    %p154 = por %p152, %p153
    %p155 = scmp.ne.s32.totalorder %s147, %s150
    %p156 = scmp.eq.s32.totalorder %s11, 0
    %p157 = por %p155, %p156
    %p158 = scmp.ne.s32.totalorder %s147, %s150
    %p159 = scmp.eq.s32.totalorder %s16, 1
    %p160 = por %p158, %p159
    %p161 = scmp.ne.s32.totalorder %s150, %s151
    %p162 = scmp.eq.s32.totalorder %s16, 0
    %p163 = por %p161, %p162
    %p164 = scmp.ne.s32.totalorder %s150, %s151
    %p165 = scmp.eq.s32.totalorder %s17, 1
    %p166 = por %p164, %p165
    %p168 = scmp.ne.s32.totalorder %s151, %s167
    %p169 = scmp.eq.s32.totalorder %s17, 0
    %p170 = por %p168, %p169
    %p171 = scmp.le.s32.totalorder 1, %s11
    %p172 = scmp.lt.s32.totalorder %s11, 3
    %p173 = pnand %p171, %p172
    %p174 = pneg %p173
    // Predicated region
    $region9: #{osg_decoder_pallas.1} parent=5 // pred_check
      _
    $region10: #{osg_decoder_pallas.1} parent=5 // pred_check_branch
      %176 = sbr.rel (%p173) target = $region12
    $region11: #{osg_decoder_pallas.1} parent=5 // pred_region
      %s177 = ssub.s32 %s11, 1
      // Predicated region
      $region13: #{osg_decoder_pallas.1} parent=11 // pred_check
        %p178 = pneg %p72
      $region14: #{osg_decoder_pallas.1} parent=11 // pred_check_branch
        %180 = sbr.rel (%p178) target = $region16
      $region15: #{osg_decoder_pallas.1} parent=11 // pred_region
        _
      $region16: #{osg_decoder_pallas.1} parent=11 // pred_fallthru
        _
      // Predicated region
      $region17: #{osg_decoder_pallas.1} parent=11 // pred_check
        %p181 = pneg %p93
      $region18: #{osg_decoder_pallas.1} parent=11 // pred_check_branch
        %183 = sbr.rel (%p181) target = $region20
      $region19: #{osg_decoder_pallas.1} parent=11 // pred_region
        _
      $region20: #{osg_decoder_pallas.1} parent=11 // pred_fallthru
        _
      // Predicated region
      $region21: #{osg_decoder_pallas.1} parent=11 // pred_check
        %p184 = pneg %p114
      $region22: #{osg_decoder_pallas.1} parent=11 // pred_check_branch
        %186 = sbr.rel (%p184) target = $region24
      $region23: #{osg_decoder_pallas.1} parent=11 // pred_region
        _
      $region24: #{osg_decoder_pallas.1} parent=11 // pred_fallthru
        _
      // Predicated region
      $region25: #{osg_decoder_pallas.1} parent=11 // pred_check
        %p187 = pneg %p135
      $region26: #{osg_decoder_pallas.1} parent=11 // pred_check_branch
        %189 = sbr.rel (%p187) target = $region28
      $region27: #{osg_decoder_pallas.1} parent=11 // pred_region
        _
      $region28: #{osg_decoder_pallas.1} parent=11 // pred_fallthru
        _
    $region12: #{osg_decoder_pallas.1} parent=5 // pred_fallthru
      _
    %p190 = scmp.lt.s32.totalorder %s11, 2
    // Predicated region
    $region29: #{osg_decoder_pallas.1} parent=5 // pred_check
      %p191 = pneg %p190
    $region30: #{osg_decoder_pallas.1} parent=5 // pred_check_branch
      %193 = sbr.rel (%p191) target = $region32
    $region31: #{osg_decoder_pallas.1} parent=5 // pred_region
      // Predicated region
      $region33: #{osg_decoder_pallas.1} parent=31 // pred_check
        %p194 = pneg %p45
      $region34: #{osg_decoder_pallas.1} parent=31 // pred_check_branch
        %196 = sbr.rel (%p194) target = $region36
      $region35: #{osg_decoder_pallas.1} parent=31 // pred_region
        %s197 = smul.u32 32, %s19
        %p198 = scmp.lt.s32.totalorder %s18, 1
        %s199 = scalar_select %p198, %s18, 1
        %p200 = scmp.lt.s32.totalorder %s197, 31
        %s201 = scalar_select %p200, %s197, 31
        %s202 = smul.addr %s199, 96
        %s203 = sadd.s32 %s201, %s202
        %s204 = smul.addr %s203, 4
        %s205 = scalar_lea.vmem %s0, %s204
        %s206 = smul.u32 32, %s19
      $region36: #{osg_decoder_pallas.1} parent=31 // pred_fallthru
        _
    $region32: #{osg_decoder_pallas.1} parent=5 // pred_fallthru
      _
    %p207 = scmp.le.s32.totalorder 1, %s11
    %p208 = scmp.lt.s32.totalorder %s11, 3
    %p209 = pnand %p207, %p208
    %p210 = pneg %p209
    // Predicated region
    $region37: #{osg_decoder_pallas.1} parent=5 // pred_check
      _
    $region38: #{osg_decoder_pallas.1} parent=5 // pred_check_branch
      %212 = sbr.rel (%p209) target = $region40
    $region39: #{osg_decoder_pallas.1} parent=5 // pred_region
      %s213 = ssub.s32 %s11, 1
      %s214 = smul.u32 32, %s21
      %p215 = scmp.lt.s32.totalorder %s20, 1
      %s216 = scalar_select %p215, %s20, 1
      %p217 = scmp.lt.s32.totalorder %s214, 31
      %s218 = scalar_select %p217, %s214, 31
      %s219 = smul.addr %s216, 96
      %s220 = sadd.s32 %s218, %s219
      %s221 = smul.addr %s220, 4
      %s222 = scalar_lea.vmem %s0, %s221
      %p223 = pneg %p51
      %p224 = pneg %p48
      %p225 = pneg %p72
      %p226 = pneg %p69
      %p227 = pneg %p93
      %p228 = pneg %p90
      %p229 = pneg %p114
      %p230 = pneg %p111
      %p231 = pneg %p135
      %p232 = pneg %p132
      %p233 = pneg %p163
      %p234 = pneg %p160
      %s235 = smul.u32 32, %s21
      %p236 = scmp.lt.s32.totalorder %s20, 1
      %s237 = scalar_select %p236, %s20, 1
      %p238 = scmp.lt.s32.totalorder %s235, 31
      %s239 = scalar_select %p238, %s235, 31
      %s240 = smul.addr %s237, 32
      %s241 = sadd.s32 %s239, %s240
      %s242 = smul.addr %s241, 8
      %s243 = scalar_lea.vmem %s5, %s242
      %s244 = smul.u32 32, %s21
      %p245 = scmp.lt.s32.totalorder %s20, 1
      %s246 = scalar_select %p245, %s20, 1
      %p247 = scmp.lt.s32.totalorder %s244, 31
      %s248 = scalar_select %p247, %s244, 31
      %s249 = smul.addr %s246, 96
      %s250 = sadd.s32 %s248, %s249
      %s251 = smul.addr %s250, 4
      %s252 = scalar_lea.vmem %s0, %s251
      %s253 = smul.u32 32, %s21
      %s254 = smul.u32 32, %s21
      %p255 = scmp.lt.s32.totalorder %s20, 1
      %s256 = scalar_select %p255, %s20, 1
      %p257 = scmp.lt.s32.totalorder %s254, 31
      %s258 = scalar_select %p257, %s254, 31
      %s259 = smul.addr %s256, 32
      %s260 = sadd.s32 %s258, %s259
      %s261 = smul.addr %s260, 8
      %s262 = scalar_lea.vmem %s5, %s261
      %s263 = smul.u32 32, %s21
      %v265 = vld [vmem:[%s1] sm:$0xf]
      %v266 = vld [vmem:[%s1 + $0x4] sm:$0xf]
      %v267 = vld [vmem:[%s1 + $0x8] sm:$0xf]
      %v268 = vld [vmem:[%s1 + $0xc] sm:$0xf]
      %v269 = vld [vmem:[%s252] sm:$0xf]
      %v270 = vld [vmem:[%s252 + $0x4] sm:$0xf]
      %v271 = vld [vmem:[%s252 + $0x8] sm:$0xf]
      %v272 = vld [vmem:[%s252 + $0xc] sm:$0xf]
      %v273 = vld [vmem:[%s252 + $0x10] sm:$0xf]
      %v274 = vld [vmem:[%s252 + $0x14] sm:$0xf]
      %v275 = vld [vmem:[%s252 + $0x18] sm:$0xf]
      %v276 = vld [vmem:[%s252 + $0x1c] sm:$0xf]
      %v277 = vld [vmem:[%s252 + $0x20] sm:$0xf]
      %v278 = vld [vmem:[%s252 + $0x24] sm:$0xf]
      %v279 = vld [vmem:[%s252 + $0x28] sm:$0xf]
      %v280 = vld [vmem:[%s252 + $0x2c] sm:$0xf]
      %v281 = vld [vmem:[%s252 + $0x30] sm:$0xf]
      %v282 = vld [vmem:[%s252 + $0x34] sm:$0xf]
      %v283 = vld [vmem:[%s252 + $0x38] sm:$0xf]
      %v284 = vld [vmem:[%s252 + $0x3c] sm:$0xf]
      %v285 = vld [vmem:[%s252 + $0x40] sm:$0xf]
      %v286 = vld [vmem:[%s252 + $0x44] sm:$0xf]
      %v287 = vld [vmem:[%s252 + $0x48] sm:$0xf]
      %v288 = vld [vmem:[%s252 + $0x4c] sm:$0xf]
      %v289 = vld [vmem:[%s252 + $0x50] sm:$0xf]
      %v290 = vld [vmem:[%s252 + $0x54] sm:$0xf]
      %v291 = vld [vmem:[%s252 + $0x58] sm:$0xf]
      %v292 = vld [vmem:[%s252 + $0x5c] sm:$0xf]
      %v293 = vld [vmem:[%s252 + $0x60] sm:$0xf]
      %v294 = vld [vmem:[%s252 + $0x64] sm:$0xf]
      %v295 = vld [vmem:[%s252 + $0x68] sm:$0xf]
      %v296 = vld [vmem:[%s252 + $0x6c] sm:$0xf]
      %v297 = vld [vmem:[%s252 + $0x70] sm:$0xf]
      %v298 = vld [vmem:[%s252 + $0x74] sm:$0xf]
      %v299 = vld [vmem:[%s252 + $0x78] sm:$0xf]
      %v300 = vld [vmem:[%s252 + $0x7c] sm:$0xf]
      %s301 = scalar_lea.vmem %s252, 128
      %v302 = vld [vmem:[%s301] sm:$0xf]
      %v303 = vld [vmem:[%s301 + $0x4] sm:$0xf]
      %v304 = vld [vmem:[%s301 + $0x8] sm:$0xf]
      %v305 = vld [vmem:[%s301 + $0xc] sm:$0xf]
      %v306 = vld [vmem:[%s301 + $0x10] sm:$0xf]
      %v307 = vld [vmem:[%s301 + $0x14] sm:$0xf]
      %v308 = vld [vmem:[%s301 + $0x18] sm:$0xf]
      %v309 = vld [vmem:[%s301 + $0x1c] sm:$0xf]
      %v310 = vld [vmem:[%s301 + $0x20] sm:$0xf]
      %v311 = vld [vmem:[%s301 + $0x24] sm:$0xf]
      %v312 = vld [vmem:[%s301 + $0x28] sm:$0xf]
      %v313 = vld [vmem:[%s301 + $0x2c] sm:$0xf]
      %v314 = vld [vmem:[%s301 + $0x30] sm:$0xf]
      %v315 = vld [vmem:[%s301 + $0x34] sm:$0xf]
      %v316 = vld [vmem:[%s301 + $0x38] sm:$0xf]
      %v317 = vld [vmem:[%s301 + $0x3c] sm:$0xf]
      %v318 = vld [vmem:[%s301 + $0x40] sm:$0xf]
      %v319 = vld [vmem:[%s301 + $0x44] sm:$0xf]
      %v320 = vld [vmem:[%s301 + $0x48] sm:$0xf]
      %v321 = vld [vmem:[%s301 + $0x4c] sm:$0xf]
      %v322 = vld [vmem:[%s301 + $0x50] sm:$0xf]
      %v323 = vld [vmem:[%s301 + $0x54] sm:$0xf]
      %v324 = vld [vmem:[%s301 + $0x58] sm:$0xf]
      %v325 = vld [vmem:[%s301 + $0x5c] sm:$0xf]
      %v326 = vld [vmem:[%s301 + $0x60] sm:$0xf]
      %v327 = vld [vmem:[%s301 + $0x64] sm:$0xf]
      %v328 = vld [vmem:[%s301 + $0x68] sm:$0xf]
      %v329 = vld [vmem:[%s301 + $0x6c] sm:$0xf]
      %v330 = vld [vmem:[%s301 + $0x70] sm:$0xf]
      %v331 = vld [vmem:[%s301 + $0x74] sm:$0xf]
      %v332 = vld [vmem:[%s301 + $0x78] sm:$0xf]
      %v333 = vld [vmem:[%s301 + $0x7c] sm:$0xf]
      %v366 = vunpack.c.l.b16 %v302
      %v367 = vunpack.c.l.b16 %v303
      %v368 = vunpack.c.l.b16 %v304
      %v369 = vunpack.c.l.b16 %v305
      %v370 = vunpack.c.l.b16 %v306
      %v371 = vunpack.c.l.b16 %v307
      %v372 = vunpack.c.l.b16 %v308
      %v373 = vunpack.c.l.b16 %v309
      %v374 = vunpack.c.l.b16 %v310
      %v375 = vunpack.c.l.b16 %v311
      %v376 = vunpack.c.l.b16 %v312
      %v377 = vunpack.c.l.b16 %v313
      %v378 = vunpack.c.l.b16 %v314
      %v379 = vunpack.c.l.b16 %v315
      %v380 = vunpack.c.l.b16 %v316
      %v381 = vunpack.c.l.b16 %v317
      %v382 = vunpack.c.l.b16 %v318
      %v383 = vunpack.c.l.b16 %v319
      %v384 = vunpack.c.l.b16 %v320
      %v385 = vunpack.c.l.b16 %v321
      %v386 = vunpack.c.l.b16 %v322
      %v387 = vunpack.c.l.b16 %v323
      %v388 = vunpack.c.l.b16 %v324
      %v389 = vunpack.c.l.b16 %v325
      %v390 = vunpack.c.l.b16 %v326
      %v391 = vunpack.c.l.b16 %v327
      %v392 = vunpack.c.l.b16 %v328
      %v393 = vunpack.c.l.b16 %v329
      %v394 = vunpack.c.l.b16 %v330
      %v395 = vunpack.c.l.b16 %v331
      %v396 = vunpack.c.l.b16 %v332
      %v397 = vunpack.c.l.b16 %v333
      %v398 = vpack.c.b16 %v367, %v366
      %v399 = vpack.c.b16 %v369, %v368
      %v400 = vpack.c.b16 %v371, %v370
      %v401 = vpack.c.b16 %v373, %v372
      %v402 = vpack.c.b16 %v375, %v374
      %v403 = vpack.c.b16 %v377, %v376
      %v404 = vpack.c.b16 %v379, %v378
      %v405 = vpack.c.b16 %v381, %v380
      %v406 = vpack.c.b16 %v383, %v382
      %v407 = vpack.c.b16 %v385, %v384
      %v408 = vpack.c.b16 %v387, %v386
      %v409 = vpack.c.b16 %v389, %v388
      %v410 = vpack.c.b16 %v391, %v390
      %v411 = vpack.c.b16 %v393, %v392
      %v412 = vpack.c.b16 %v395, %v394
      %v413 = vpack.c.b16 %v397, %v396
      %v418 = vunpack.c.l.b16 %v265
      %v419 = vunpack.c.l.b16 %v266
      %v420 = vunpack.c.l.b16 %v267
      %v421 = vunpack.c.l.b16 %v268
      %v422 = vpack.c.b16 %v419, %v418
      %v423 = vpack.c.b16 %v421, %v420
      %vm426 = vcmask 261120
      %v428 = vsel %vm426, %v398, 0
      %v431 = vsel %vm426, %v399, 0
      %v434 = vsel %vm426, %v400, 0
      %v437 = vsel %vm426, %v401, 0
      %v440 = vsel %vm426, %v402, 0
      %v443 = vsel %vm426, %v403, 0
      %v446 = vsel %vm426, %v404, 0
      %v449 = vsel %vm426, %v405, 0
      %v452 = vsel %vm426, %v406, 0
      %v455 = vsel %vm426, %v407, 0
      %v458 = vsel %vm426, %v408, 0
      %v461 = vsel %vm426, %v409, 0
      %v464 = vsel %vm426, %v410, 0
      %v467 = vsel %vm426, %v411, 0
      %v470 = vsel %vm426, %v412, 0
      %v473 = vsel %vm426, %v413, 0
      %475 = vmatpush.bf16.msra.mxu0 0
      %476 = vmatpush.bf16.msra.mxu0 0
      %477 = vmatpush.bf16.msra.mxu0 0
      %478 = vmatpush.bf16.msra.mxu0 0
      %479 = vmatpush.bf16.msra.mxu0 0
      %480 = vmatpush.bf16.msra.mxu0 0
      %481 = vmatpush.bf16.msra.mxu0 %v423
      %482 = vmatpush.bf16.msra.mxu0 %v422
      %483 = vmatmul.bf16.gmra.mxu0 %v428
      %v484 = vpop.f32.mrf.mxu0
      %v485 = vadd.f32 0.0, %v484
      %v486 = vpop.f32.mrf.mxu0
      %v487 = vadd.f32 0.0, %v486
      %488 = vmatmul.bf16.gmra.mxu0 %v431
      %v489 = vpop.f32.mrf.mxu0
      %v490 = vadd.f32 0.0, %v489
      %v491 = vpop.f32.mrf.mxu0
      %v492 = vadd.f32 0.0, %v491
      %493 = vmatmul.bf16.gmra.mxu0 %v434
      %v494 = vpop.f32.mrf.mxu0
      %v495 = vadd.f32 0.0, %v494
      %v496 = vpop.f32.mrf.mxu0
      %v497 = vadd.f32 0.0, %v496
      %498 = vmatmul.bf16.gmra.mxu0 %v437
      %v499 = vpop.f32.mrf.mxu0
      %v500 = vadd.f32 0.0, %v499
      %v501 = vpop.f32.mrf.mxu0
      %v502 = vadd.f32 0.0, %v501
      %503 = vmatmul.bf16.gmra.mxu0 %v440
      %v504 = vpop.f32.mrf.mxu0
      %v505 = vadd.f32 0.0, %v504
      %v506 = vpop.f32.mrf.mxu0
      %v507 = vadd.f32 0.0, %v506
      %508 = vmatmul.bf16.gmra.mxu0 %v443
      %v509 = vpop.f32.mrf.mxu0
      %v510 = vadd.f32 0.0, %v509
      %v511 = vpop.f32.mrf.mxu0
      %v512 = vadd.f32 0.0, %v511
      %513 = vmatmul.bf16.gmra.mxu0 %v446
      %v514 = vpop.f32.mrf.mxu0
      %v515 = vadd.f32 0.0, %v514
      %v516 = vpop.f32.mrf.mxu0
      %v517 = vadd.f32 0.0, %v516
      %518 = vmatmul.bf16.gmra.mxu0 %v449
      %v519 = vpop.f32.mrf.mxu0
      %v520 = vadd.f32 0.0, %v519
      %v521 = vpop.f32.mrf.mxu0
      %v522 = vadd.f32 0.0, %v521
      %523 = vmatmul.bf16.gmra.mxu0 %v452
      %v524 = vpop.f32.mrf.mxu0
      %v525 = vadd.f32 0.0, %v524
      %v526 = vpop.f32.mrf.mxu0
      %v527 = vadd.f32 0.0, %v526
      %528 = vmatmul.bf16.gmra.mxu0 %v455
      %v529 = vpop.f32.mrf.mxu0
      %v530 = vadd.f32 0.0, %v529
      %v531 = vpop.f32.mrf.mxu0
      %v532 = vadd.f32 0.0, %v531
      %533 = vmatmul.bf16.gmra.mxu0 %v458
      %v534 = vpop.f32.mrf.mxu0
      %v535 = vadd.f32 0.0, %v534
      %v536 = vpop.f32.mrf.mxu0
      %v537 = vadd.f32 0.0, %v536
      %538 = vmatmul.bf16.gmra.mxu0 %v461
      %v539 = vpop.f32.mrf.mxu0
      %v540 = vadd.f32 0.0, %v539
      %v541 = vpop.f32.mrf.mxu0
      %v542 = vadd.f32 0.0, %v541
      %543 = vmatmul.bf16.gmra.mxu0 %v464
      %v544 = vpop.f32.mrf.mxu0
      %v545 = vadd.f32 0.0, %v544
      %v546 = vpop.f32.mrf.mxu0
      %v547 = vadd.f32 0.0, %v546
      %548 = vmatmul.bf16.gmra.mxu0 %v467
      %v549 = vpop.f32.mrf.mxu0
      %v550 = vadd.f32 0.0, %v549
      %v551 = vpop.f32.mrf.mxu0
      %v552 = vadd.f32 0.0, %v551
      %553 = vmatmul.bf16.gmra.mxu0 %v470
      %v554 = vpop.f32.mrf.mxu0
      %v555 = vadd.f32 0.0, %v554
      %v556 = vpop.f32.mrf.mxu0
      %v557 = vadd.f32 0.0, %v556
      %558 = vmatmul.bf16.gmra.mxu0 %v473
      %v559 = vpop.f32.mrf.mxu0
      %v560 = vadd.f32 0.0, %v559
      %v561 = vpop.f32.mrf.mxu0
      %v562 = vadd.f32 0.0, %v561
      %563 = vdwg.mxu0
      %v596 = vunpack.c.l.b16 %v269
      %v597 = vunpack.c.l.b16 %v270
      %v598 = vunpack.c.l.b16 %v271
      %v599 = vunpack.c.l.b16 %v272
      %v600 = vunpack.c.l.b16 %v273
      %v601 = vunpack.c.l.b16 %v274
      %v602 = vunpack.c.l.b16 %v275
      %v603 = vunpack.c.l.b16 %v276
      %v604 = vunpack.c.l.b16 %v277
      %v605 = vunpack.c.l.b16 %v278
      %v606 = vunpack.c.l.b16 %v279
      %v607 = vunpack.c.l.b16 %v280
      %v608 = vunpack.c.l.b16 %v281
      %v609 = vunpack.c.l.b16 %v282
      %v610 = vunpack.c.l.b16 %v283
      %v611 = vunpack.c.l.b16 %v284
      %v612 = vunpack.c.l.b16 %v285
      %v613 = vunpack.c.l.b16 %v286
      %v614 = vunpack.c.l.b16 %v287
      %v615 = vunpack.c.l.b16 %v288
      %v616 = vunpack.c.l.b16 %v289
      %v617 = vunpack.c.l.b16 %v290
      %v618 = vunpack.c.l.b16 %v291
      %v619 = vunpack.c.l.b16 %v292
      %v620 = vunpack.c.l.b16 %v293
      %v621 = vunpack.c.l.b16 %v294
      %v622 = vunpack.c.l.b16 %v295
      %v623 = vunpack.c.l.b16 %v296
      %v624 = vunpack.c.l.b16 %v297
      %v625 = vunpack.c.l.b16 %v298
      %v626 = vunpack.c.l.b16 %v299
      %v627 = vunpack.c.l.b16 %v300
      %v628 = vpack.c.b16 %v597, %v596
      %v629 = vpack.c.b16 %v599, %v598
      %v630 = vpack.c.b16 %v601, %v600
      %v631 = vpack.c.b16 %v603, %v602
      %v632 = vpack.c.b16 %v605, %v604
      %v633 = vpack.c.b16 %v607, %v606
      %v634 = vpack.c.b16 %v609, %v608
      %v635 = vpack.c.b16 %v611, %v610
      %v636 = vpack.c.b16 %v613, %v612
      %v637 = vpack.c.b16 %v615, %v614
      %v638 = vpack.c.b16 %v617, %v616
      %v639 = vpack.c.b16 %v619, %v618
      %v640 = vpack.c.b16 %v621, %v620
      %v641 = vpack.c.b16 %v623, %v622
      %v642 = vpack.c.b16 %v625, %v624
      %v643 = vpack.c.b16 %v627, %v626
      %v645 = vsel %vm426, %v628, 0
      %v648 = vsel %vm426, %v629, 0
      %v651 = vsel %vm426, %v630, 0
      %v654 = vsel %vm426, %v631, 0
      %v657 = vsel %vm426, %v632, 0
      %v660 = vsel %vm426, %v633, 0
      %v663 = vsel %vm426, %v634, 0
      %v666 = vsel %vm426, %v635, 0
      %v669 = vsel %vm426, %v636, 0
      %v672 = vsel %vm426, %v637, 0
      %v675 = vsel %vm426, %v638, 0
      %v678 = vsel %vm426, %v639, 0
      %v681 = vsel %vm426, %v640, 0
      %v684 = vsel %vm426, %v641, 0
      %v687 = vsel %vm426, %v642, 0
      %v690 = vsel %vm426, %v643, 0
      %692 = vmatpush.bf16.msra.mxu0 0
      %693 = vmatpush.bf16.msra.mxu0 0
      %694 = vmatpush.bf16.msra.mxu0 0
      %695 = vmatpush.bf16.msra.mxu0 0
      %696 = vmatpush.bf16.msra.mxu0 0
      %697 = vmatpush.bf16.msra.mxu0 0
      %698 = vmatpush.bf16.msra.mxu0 %v423
      %699 = vmatpush.bf16.msra.mxu0 %v422
      %700 = vmatmul.bf16.gmra.mxu0 %v645
      %v701 = vpop.f32.mrf.mxu0
      %v702 = vadd.f32 %v485, %v701
      %v703 = vpop.f32.mrf.mxu0
      %v704 = vadd.f32 %v487, %v703
      %705 = vmatmul.bf16.gmra.mxu0 %v648
      %v706 = vpop.f32.mrf.mxu0
      %v707 = vadd.f32 %v490, %v706
      %v708 = vpop.f32.mrf.mxu0
      %v709 = vadd.f32 %v492, %v708
      %710 = vmatmul.bf16.gmra.mxu0 %v651
      %v711 = vpop.f32.mrf.mxu0
      %v712 = vadd.f32 %v495, %v711
      %v713 = vpop.f32.mrf.mxu0
      %v714 = vadd.f32 %v497, %v713
      %715 = vmatmul.bf16.gmra.mxu0 %v654
      %v716 = vpop.f32.mrf.mxu0
      %v717 = vadd.f32 %v500, %v716
      %v718 = vpop.f32.mrf.mxu0
      %v719 = vadd.f32 %v502, %v718
      %720 = vmatmul.bf16.gmra.mxu0 %v657
      %v721 = vpop.f32.mrf.mxu0
      %v722 = vadd.f32 %v505, %v721
      %v723 = vpop.f32.mrf.mxu0
      %v724 = vadd.f32 %v507, %v723
      %725 = vmatmul.bf16.gmra.mxu0 %v660
      %v726 = vpop.f32.mrf.mxu0
      %v727 = vadd.f32 %v510, %v726
      %v728 = vpop.f32.mrf.mxu0
      %v729 = vadd.f32 %v512, %v728
      %730 = vmatmul.bf16.gmra.mxu0 %v663
      %v731 = vpop.f32.mrf.mxu0
      %v732 = vadd.f32 %v515, %v731
      %v733 = vpop.f32.mrf.mxu0
      %v734 = vadd.f32 %v517, %v733
      %735 = vmatmul.bf16.gmra.mxu0 %v666
      %v736 = vpop.f32.mrf.mxu0
      %v737 = vadd.f32 %v520, %v736
      %v738 = vpop.f32.mrf.mxu0
      %v739 = vadd.f32 %v522, %v738
      %740 = vmatmul.bf16.gmra.mxu0 %v669
      %v741 = vpop.f32.mrf.mxu0
      %v742 = vadd.f32 %v525, %v741
      %v743 = vpop.f32.mrf.mxu0
      %v744 = vadd.f32 %v527, %v743
      %745 = vmatmul.bf16.gmra.mxu0 %v672
      %v746 = vpop.f32.mrf.mxu0
      %v747 = vadd.f32 %v530, %v746
      %v748 = vpop.f32.mrf.mxu0
      %v749 = vadd.f32 %v532, %v748
      %750 = vmatmul.bf16.gmra.mxu0 %v675
      %v751 = vpop.f32.mrf.mxu0
      %v752 = vadd.f32 %v535, %v751
      %v753 = vpop.f32.mrf.mxu0
      %v754 = vadd.f32 %v537, %v753
      %755 = vmatmul.bf16.gmra.mxu0 %v678
      %v756 = vpop.f32.mrf.mxu0
      %v757 = vadd.f32 %v540, %v756
      %v758 = vpop.f32.mrf.mxu0
      %v759 = vadd.f32 %v542, %v758
      %760 = vmatmul.bf16.gmra.mxu0 %v681
      %v761 = vpop.f32.mrf.mxu0
      %v762 = vadd.f32 %v545, %v761
      %v763 = vpop.f32.mrf.mxu0
      %v764 = vadd.f32 %v547, %v763
      %765 = vmatmul.bf16.gmra.mxu0 %v684
      %v766 = vpop.f32.mrf.mxu0
      %v767 = vadd.f32 %v550, %v766
      %v768 = vpop.f32.mrf.mxu0
      %v769 = vadd.f32 %v552, %v768
      %770 = vmatmul.bf16.gmra.mxu0 %v687
      %v771 = vpop.f32.mrf.mxu0
      %v772 = vadd.f32 %v555, %v771
      %v773 = vpop.f32.mrf.mxu0
      %v774 = vadd.f32 %v557, %v773
      %775 = vmatmul.bf16.gmra.mxu0 %v690
      %v776 = vpop.f32.mrf.mxu0
      %v777 = vadd.f32 %v560, %v776
      %v778 = vpop.f32.mrf.mxu0
      %v779 = vadd.f32 %v562, %v778
      %780 = vdwg.mxu0
      %s781 = scalar_lea.vmem %s252, 256
      %v782 = vld [vmem:[%s781] sm:$0xf]
      %v783 = vld [vmem:[%s781 + $0x4] sm:$0xf]
      %v784 = vld [vmem:[%s781 + $0x8] sm:$0xf]
      %v785 = vld [vmem:[%s781 + $0xc] sm:$0xf]
      %v786 = vld [vmem:[%s781 + $0x10] sm:$0xf]
      %v787 = vld [vmem:[%s781 + $0x14] sm:$0xf]
      %v788 = vld [vmem:[%s781 + $0x18] sm:$0xf]
      %v789 = vld [vmem:[%s781 + $0x1c] sm:$0xf]
      %v790 = vld [vmem:[%s781 + $0x20] sm:$0xf]
      %v791 = vld [vmem:[%s781 + $0x24] sm:$0xf]
      %v792 = vld [vmem:[%s781 + $0x28] sm:$0xf]
      %v793 = vld [vmem:[%s781 + $0x2c] sm:$0xf]
      %v794 = vld [vmem:[%s781 + $0x30] sm:$0xf]
      %v795 = vld [vmem:[%s781 + $0x34] sm:$0xf]
      %v796 = vld [vmem:[%s781 + $0x38] sm:$0xf]
      %v797 = vld [vmem:[%s781 + $0x3c] sm:$0xf]
      %v798 = vld [vmem:[%s781 + $0x40] sm:$0xf]
      %v799 = vld [vmem:[%s781 + $0x44] sm:$0xf]
      %v800 = vld [vmem:[%s781 + $0x48] sm:$0xf]
      %v801 = vld [vmem:[%s781 + $0x4c] sm:$0xf]
      %v802 = vld [vmem:[%s781 + $0x50] sm:$0xf]
      %v803 = vld [vmem:[%s781 + $0x54] sm:$0xf]
      %v804 = vld [vmem:[%s781 + $0x58] sm:$0xf]
      %v805 = vld [vmem:[%s781 + $0x5c] sm:$0xf]
      %v806 = vld [vmem:[%s781 + $0x60] sm:$0xf]
      %v807 = vld [vmem:[%s781 + $0x64] sm:$0xf]
      %v808 = vld [vmem:[%s781 + $0x68] sm:$0xf]
      %v809 = vld [vmem:[%s781 + $0x6c] sm:$0xf]
      %v810 = vld [vmem:[%s781 + $0x70] sm:$0xf]
      %v811 = vld [vmem:[%s781 + $0x74] sm:$0xf]
      %v812 = vld [vmem:[%s781 + $0x78] sm:$0xf]
      %v813 = vld [vmem:[%s781 + $0x7c] sm:$0xf]
      %v846 = vunpack.c.l.b16 %v782
      %v847 = vunpack.c.l.b16 %v783
      %v848 = vunpack.c.l.b16 %v784
      %v849 = vunpack.c.l.b16 %v785
      %v850 = vunpack.c.l.b16 %v786
      %v851 = vunpack.c.l.b16 %v787
      %v852 = vunpack.c.l.b16 %v788
      %v853 = vunpack.c.l.b16 %v789
      %v854 = vunpack.c.l.b16 %v790
      %v855 = vunpack.c.l.b16 %v791
      %v856 = vunpack.c.l.b16 %v792
      %v857 = vunpack.c.l.b16 %v793
      %v858 = vunpack.c.l.b16 %v794
      %v859 = vunpack.c.l.b16 %v795
      %v860 = vunpack.c.l.b16 %v796
      %v861 = vunpack.c.l.b16 %v797
      %v862 = vunpack.c.l.b16 %v798
      %v863 = vunpack.c.l.b16 %v799
      %v864 = vunpack.c.l.b16 %v800
      %v865 = vunpack.c.l.b16 %v801
      %v866 = vunpack.c.l.b16 %v802
      %v867 = vunpack.c.l.b16 %v803
      %v868 = vunpack.c.l.b16 %v804
      %v869 = vunpack.c.l.b16 %v805
      %v870 = vunpack.c.l.b16 %v806
      %v871 = vunpack.c.l.b16 %v807
      %v872 = vunpack.c.l.b16 %v808
      %v873 = vunpack.c.l.b16 %v809
      %v874 = vunpack.c.l.b16 %v810
      %v875 = vunpack.c.l.b16 %v811
      %v876 = vunpack.c.l.b16 %v812
      %v877 = vunpack.c.l.b16 %v813
      %v878 = vpack.c.b16 %v847, %v846
      %v879 = vpack.c.b16 %v849, %v848
      %v880 = vpack.c.b16 %v851, %v850
      %v881 = vpack.c.b16 %v853, %v852
      %v882 = vpack.c.b16 %v855, %v854
      %v883 = vpack.c.b16 %v857, %v856
      %v884 = vpack.c.b16 %v859, %v858
      %v885 = vpack.c.b16 %v861, %v860
      %v886 = vpack.c.b16 %v863, %v862
      %v887 = vpack.c.b16 %v865, %v864
      %v888 = vpack.c.b16 %v867, %v866
      %v889 = vpack.c.b16 %v869, %v868
      %v890 = vpack.c.b16 %v871, %v870
      %v891 = vpack.c.b16 %v873, %v872
      %v892 = vpack.c.b16 %v875, %v874
      %v893 = vpack.c.b16 %v877, %v876
      %v895 = vsel %vm426, %v878, 0
      %v898 = vsel %vm426, %v879, 0
      %v901 = vsel %vm426, %v880, 0
      %v904 = vsel %vm426, %v881, 0
      %v907 = vsel %vm426, %v882, 0
      %v910 = vsel %vm426, %v883, 0
      %v913 = vsel %vm426, %v884, 0
      %v916 = vsel %vm426, %v885, 0
      %v919 = vsel %vm426, %v886, 0
      %v922 = vsel %vm426, %v887, 0
      %v925 = vsel %vm426, %v888, 0
      %v928 = vsel %vm426, %v889, 0
      %v931 = vsel %vm426, %v890, 0
      %v934 = vsel %vm426, %v891, 0
      %v937 = vsel %vm426, %v892, 0
      %v940 = vsel %vm426, %v893, 0
      %942 = vmatpush.bf16.msra.mxu0 0
      %943 = vmatpush.bf16.msra.mxu0 0
      %944 = vmatpush.bf16.msra.mxu0 0
      %945 = vmatpush.bf16.msra.mxu0 0
      %946 = vmatpush.bf16.msra.mxu0 0
      %947 = vmatpush.bf16.msra.mxu0 0
      %948 = vmatpush.bf16.msra.mxu0 %v423
      %949 = vmatpush.bf16.msra.mxu0 %v422
      %950 = vmatmul.bf16.gmra.mxu0 %v895
      %v951 = vpop.f32.mrf.mxu0
      %v952 = vadd.f32 0.0, %v951
      %v953 = vpop.f32.mrf.mxu0
      %v954 = vadd.f32 0.0, %v953
      %955 = vmatmul.bf16.gmra.mxu0 %v898
      %v956 = vpop.f32.mrf.mxu0
      %v957 = vadd.f32 0.0, %v956
      %v958 = vpop.f32.mrf.mxu0
      %v959 = vadd.f32 0.0, %v958
      %960 = vmatmul.bf16.gmra.mxu0 %v901
      %v961 = vpop.f32.mrf.mxu0
      %v962 = vadd.f32 0.0, %v961
      %v963 = vpop.f32.mrf.mxu0
      %v964 = vadd.f32 0.0, %v963
      %965 = vmatmul.bf16.gmra.mxu0 %v904
      %v966 = vpop.f32.mrf.mxu0
      %v967 = vadd.f32 0.0, %v966
      %v968 = vpop.f32.mrf.mxu0
      %v969 = vadd.f32 0.0, %v968
      %970 = vmatmul.bf16.gmra.mxu0 %v907
      %v971 = vpop.f32.mrf.mxu0
      %v972 = vadd.f32 0.0, %v971
      %v973 = vpop.f32.mrf.mxu0
      %v974 = vadd.f32 0.0, %v973
      %975 = vmatmul.bf16.gmra.mxu0 %v910
      %v976 = vpop.f32.mrf.mxu0
      %v977 = vadd.f32 0.0, %v976
      %v978 = vpop.f32.mrf.mxu0
      %v979 = vadd.f32 0.0, %v978
      %980 = vmatmul.bf16.gmra.mxu0 %v913
      %v981 = vpop.f32.mrf.mxu0
      %v982 = vadd.f32 0.0, %v981
      %v983 = vpop.f32.mrf.mxu0
      %v984 = vadd.f32 0.0, %v983
      %985 = vmatmul.bf16.gmra.mxu0 %v916
      %v986 = vpop.f32.mrf.mxu0
      %v987 = vadd.f32 0.0, %v986
      %v988 = vpop.f32.mrf.mxu0
      %v989 = vadd.f32 0.0, %v988
      %990 = vmatmul.bf16.gmra.mxu0 %v919
      %v991 = vpop.f32.mrf.mxu0
      %v992 = vadd.f32 0.0, %v991
      %v993 = vpop.f32.mrf.mxu0
      %v994 = vadd.f32 0.0, %v993
      %995 = vmatmul.bf16.gmra.mxu0 %v922
      %v996 = vpop.f32.mrf.mxu0
      %v997 = vadd.f32 0.0, %v996
      %v998 = vpop.f32.mrf.mxu0
      %v999 = vadd.f32 0.0, %v998
      %1000 = vmatmul.bf16.gmra.mxu0 %v925
      %v1001 = vpop.f32.mrf.mxu0
      %v1002 = vadd.f32 0.0, %v1001
      %v1003 = vpop.f32.mrf.mxu0
      %v1004 = vadd.f32 0.0, %v1003
      %1005 = vmatmul.bf16.gmra.mxu0 %v928
      %v1006 = vpop.f32.mrf.mxu0
      %v1007 = vadd.f32 0.0, %v1006
      %v1008 = vpop.f32.mrf.mxu0
      %v1009 = vadd.f32 0.0, %v1008
      %1010 = vmatmul.bf16.gmra.mxu0 %v931
      %v1011 = vpop.f32.mrf.mxu0
      %v1012 = vadd.f32 0.0, %v1011
      %v1013 = vpop.f32.mrf.mxu0
      %v1014 = vadd.f32 0.0, %v1013
      %1015 = vmatmul.bf16.gmra.mxu0 %v934
      %v1016 = vpop.f32.mrf.mxu0
      %v1017 = vadd.f32 0.0, %v1016
      %v1018 = vpop.f32.mrf.mxu0
      %v1019 = vadd.f32 0.0, %v1018
      %1020 = vmatmul.bf16.gmra.mxu0 %v937
      %v1021 = vpop.f32.mrf.mxu0
      %v1022 = vadd.f32 0.0, %v1021
      %v1023 = vpop.f32.mrf.mxu0
      %v1024 = vadd.f32 0.0, %v1023
      %1025 = vmatmul.bf16.gmra.mxu0 %v940
      %v1026 = vpop.f32.mrf.mxu0
      %v1027 = vadd.f32 0.0, %v1026
      %v1028 = vpop.f32.mrf.mxu0
      %v1029 = vadd.f32 0.0, %v1028
      %1030 = vdwg.mxu0
      %v1031 = vadd.f32 %v702, %v952
      %v1032 = vadd.f32 %v704, %v954
      %v1033 = vadd.f32 %v707, %v957
      %v1034 = vadd.f32 %v709, %v959
      %v1035 = vadd.f32 %v712, %v962
      %v1036 = vadd.f32 %v714, %v964
      %v1037 = vadd.f32 %v717, %v967
      %v1038 = vadd.f32 %v719, %v969
      %v1039 = vadd.f32 %v722, %v972
      %v1040 = vadd.f32 %v724, %v974
      %v1041 = vadd.f32 %v727, %v977
      %v1042 = vadd.f32 %v729, %v979
      %v1043 = vadd.f32 %v732, %v982
      %v1044 = vadd.f32 %v734, %v984
      %v1045 = vadd.f32 %v737, %v987
      %v1046 = vadd.f32 %v739, %v989
      %v1047 = vadd.f32 %v742, %v992
      %v1048 = vadd.f32 %v744, %v994
      %v1049 = vadd.f32 %v747, %v997
      %v1050 = vadd.f32 %v749, %v999
      %v1051 = vadd.f32 %v752, %v1002
      %v1052 = vadd.f32 %v754, %v1004
      %v1053 = vadd.f32 %v757, %v1007
      %v1054 = vadd.f32 %v759, %v1009
      %v1055 = vadd.f32 %v762, %v1012
      %v1056 = vadd.f32 %v764, %v1014
      %v1057 = vadd.f32 %v767, %v1017
      %v1058 = vadd.f32 %v769, %v1019
      %v1059 = vadd.f32 %v772, %v1022
      %v1060 = vadd.f32 %v774, %v1024
      %v1061 = vadd.f32 %v777, %v1027
      %v1062 = vadd.f32 %v779, %v1029
      %v1063 = vld [vmem:[%s2] sm:$0x1]
      %v1065 = vperm.slane %v1063, 0
      %v1067 = vadd.f32 %v1031, %v1065
      %v1068 = vadd.f32 %v1032, %v1065
      %v1069 = vadd.f32 %v1033, %v1065
      %v1070 = vadd.f32 %v1034, %v1065
      %v1071 = vadd.f32 %v1035, %v1065
      %v1072 = vadd.f32 %v1036, %v1065
      %v1073 = vadd.f32 %v1037, %v1065
      %v1074 = vadd.f32 %v1038, %v1065
      %v1075 = vadd.f32 %v1039, %v1065
      %v1076 = vadd.f32 %v1040, %v1065
      %v1077 = vadd.f32 %v1041, %v1065
      %v1078 = vadd.f32 %v1042, %v1065
      %v1079 = vadd.f32 %v1043, %v1065
      %v1080 = vadd.f32 %v1044, %v1065
      %v1081 = vadd.f32 %v1045, %v1065
      %v1082 = vadd.f32 %v1046, %v1065
      %v1083 = vadd.f32 %v1047, %v1065
      %v1084 = vadd.f32 %v1048, %v1065
      %v1085 = vadd.f32 %v1049, %v1065
      %v1086 = vadd.f32 %v1050, %v1065
      %v1087 = vadd.f32 %v1051, %v1065
      %v1088 = vadd.f32 %v1052, %v1065
      %v1089 = vadd.f32 %v1053, %v1065
      %v1090 = vadd.f32 %v1054, %v1065
      %v1091 = vadd.f32 %v1055, %v1065
      %v1092 = vadd.f32 %v1056, %v1065
      %v1093 = vadd.f32 %v1057, %v1065
      %v1094 = vadd.f32 %v1058, %v1065
      %v1095 = vadd.f32 %v1059, %v1065
      %v1096 = vadd.f32 %v1060, %v1065
      %v1097 = vadd.f32 %v1061, %v1065
      %v1098 = vadd.f32 %v1062, %v1065
      %v1099 = vmax.f32 %v1067, 0.0
      %v1100 = vmax.f32 %v1068, 0.0
      %v1101 = vmax.f32 %v1069, 0.0
      %v1102 = vmax.f32 %v1070, 0.0
      %v1103 = vmax.f32 %v1071, 0.0
      %v1104 = vmax.f32 %v1072, 0.0
      %v1105 = vmax.f32 %v1073, 0.0
      %v1106 = vmax.f32 %v1074, 0.0
      %v1107 = vmax.f32 %v1075, 0.0
      %v1108 = vmax.f32 %v1076, 0.0
      %v1109 = vmax.f32 %v1077, 0.0
      %v1110 = vmax.f32 %v1078, 0.0
      %v1111 = vmax.f32 %v1079, 0.0
      %v1112 = vmax.f32 %v1080, 0.0
      %v1113 = vmax.f32 %v1081, 0.0
      %v1114 = vmax.f32 %v1082, 0.0
      %v1115 = vmax.f32 %v1083, 0.0
      %v1116 = vmax.f32 %v1084, 0.0
      %v1117 = vmax.f32 %v1085, 0.0
      %v1118 = vmax.f32 %v1086, 0.0
      %v1119 = vmax.f32 %v1087, 0.0
      %v1120 = vmax.f32 %v1088, 0.0
      %v1121 = vmax.f32 %v1089, 0.0
      %v1122 = vmax.f32 %v1090, 0.0
      %v1123 = vmax.f32 %v1091, 0.0
      %v1124 = vmax.f32 %v1092, 0.0
      %v1125 = vmax.f32 %v1093, 0.0
      %v1126 = vmax.f32 %v1094, 0.0
      %v1127 = vmax.f32 %v1095, 0.0
      %v1128 = vmax.f32 %v1096, 0.0
      %v1129 = vmax.f32 %v1097, 0.0
      %v1130 = vmax.f32 %v1098, 0.0
      %vm1131 = vcmp.ne.f32.partialorder %v1067, %v1067
      %vm1132 = vcmp.ne.f32.partialorder %v1068, %v1068
      %vm1133 = vcmp.ne.f32.partialorder %v1069, %v1069
      %vm1134 = vcmp.ne.f32.partialorder %v1070, %v1070
      %vm1135 = vcmp.ne.f32.partialorder %v1071, %v1071
      %vm1136 = vcmp.ne.f32.partialorder %v1072, %v1072
      %vm1137 = vcmp.ne.f32.partialorder %v1073, %v1073
      %vm1138 = vcmp.ne.f32.partialorder %v1074, %v1074
      %vm1139 = vcmp.ne.f32.partialorder %v1075, %v1075
      %vm1140 = vcmp.ne.f32.partialorder %v1076, %v1076
      %vm1141 = vcmp.ne.f32.partialorder %v1077, %v1077
      %vm1142 = vcmp.ne.f32.partialorder %v1078, %v1078
      %vm1143 = vcmp.ne.f32.partialorder %v1079, %v1079
      %vm1144 = vcmp.ne.f32.partialorder %v1080, %v1080
      %vm1145 = vcmp.ne.f32.partialorder %v1081, %v1081
      %vm1146 = vcmp.ne.f32.partialorder %v1082, %v1082
      %vm1147 = vcmp.ne.f32.partialorder %v1083, %v1083
      %vm1148 = vcmp.ne.f32.partialorder %v1084, %v1084
      %vm1149 = vcmp.ne.f32.partialorder %v1085, %v1085
      %vm1150 = vcmp.ne.f32.partialorder %v1086, %v1086
      %vm1151 = vcmp.ne.f32.partialorder %v1087, %v1087
      %vm1152 = vcmp.ne.f32.partialorder %v1088, %v1088
      %vm1153 = vcmp.ne.f32.partialorder %v1089, %v1089
      %vm1154 = vcmp.ne.f32.partialorder %v1090, %v1090
      %vm1155 = vcmp.ne.f32.partialorder %v1091, %v1091
      %vm1156 = vcmp.ne.f32.partialorder %v1092, %v1092
      %vm1157 = vcmp.ne.f32.partialorder %v1093, %v1093
      %vm1158 = vcmp.ne.f32.partialorder %v1094, %v1094
      %vm1159 = vcmp.ne.f32.partialorder %v1095, %v1095
      %vm1160 = vcmp.ne.f32.partialorder %v1096, %v1096
      %vm1161 = vcmp.ne.f32.partialorder %v1097, %v1097
      %vm1162 = vcmp.ne.f32.partialorder %v1098, %v1098
      %v1163 = vadd.f32 %v1067, 0.0
      %v1164 = vadd.f32 %v1068, 0.0
      %v1165 = vadd.f32 %v1069, 0.0
      %v1166 = vadd.f32 %v1070, 0.0
      %v1167 = vadd.f32 %v1071, 0.0
      %v1168 = vadd.f32 %v1072, 0.0
      %v1169 = vadd.f32 %v1073, 0.0
      %v1170 = vadd.f32 %v1074, 0.0
      %v1171 = vadd.f32 %v1075, 0.0
      %v1172 = vadd.f32 %v1076, 0.0
      %v1173 = vadd.f32 %v1077, 0.0
      %v1174 = vadd.f32 %v1078, 0.0
      %v1175 = vadd.f32 %v1079, 0.0
      %v1176 = vadd.f32 %v1080, 0.0
      %v1177 = vadd.f32 %v1081, 0.0
      %v1178 = vadd.f32 %v1082, 0.0
      %v1179 = vadd.f32 %v1083, 0.0
      %v1180 = vadd.f32 %v1084, 0.0
      %v1181 = vadd.f32 %v1085, 0.0
      %v1182 = vadd.f32 %v1086, 0.0
      %v1183 = vadd.f32 %v1087, 0.0
      %v1184 = vadd.f32 %v1088, 0.0
      %v1185 = vadd.f32 %v1089, 0.0
      %v1186 = vadd.f32 %v1090, 0.0
      %v1187 = vadd.f32 %v1091, 0.0
      %v1188 = vadd.f32 %v1092, 0.0
      %v1189 = vadd.f32 %v1093, 0.0
      %v1190 = vadd.f32 %v1094, 0.0
      %v1191 = vadd.f32 %v1095, 0.0
      %v1192 = vadd.f32 %v1096, 0.0
      %v1193 = vadd.f32 %v1097, 0.0
      %v1194 = vadd.f32 %v1098, 0.0
      %v1195 = vand.u32 2147483647, %v1067
      %v1196 = vand.u32 2147483647, %v1068
      %v1197 = vand.u32 2147483647, %v1069
      %v1198 = vand.u32 2147483647, %v1070
      %v1199 = vand.u32 2147483647, %v1071
      %v1200 = vand.u32 2147483647, %v1072
      %v1201 = vand.u32 2147483647, %v1073
      %v1202 = vand.u32 2147483647, %v1074
      %v1203 = vand.u32 2147483647, %v1075
      %v1204 = vand.u32 2147483647, %v1076
      %v1205 = vand.u32 2147483647, %v1077
      %v1206 = vand.u32 2147483647, %v1078
      %v1207 = vand.u32 2147483647, %v1079
      %v1208 = vand.u32 2147483647, %v1080
      %v1209 = vand.u32 2147483647, %v1081
      %v1210 = vand.u32 2147483647, %v1082
      %v1211 = vand.u32 2147483647, %v1083
      %v1212 = vand.u32 2147483647, %v1084
      %v1213 = vand.u32 2147483647, %v1085
      %v1214 = vand.u32 2147483647, %v1086
      %v1215 = vand.u32 2147483647, %v1087
      %v1216 = vand.u32 2147483647, %v1088
      %v1217 = vand.u32 2147483647, %v1089
      %v1218 = vand.u32 2147483647, %v1090
      %v1219 = vand.u32 2147483647, %v1091
      %v1220 = vand.u32 2147483647, %v1092
      %v1221 = vand.u32 2147483647, %v1093
      %v1222 = vand.u32 2147483647, %v1094
      %v1223 = vand.u32 2147483647, %v1095
      %v1224 = vand.u32 2147483647, %v1096
      %v1225 = vand.u32 2147483647, %v1097
      %v1226 = vand.u32 2147483647, %v1098
      %v1227 = vsub.f32 0.0, %v1195
      %v1228 = vsub.f32 0.0, %v1196
      %v1229 = vsub.f32 0.0, %v1197
      %v1230 = vsub.f32 0.0, %v1198
      %v1231 = vsub.f32 0.0, %v1199
      %v1232 = vsub.f32 0.0, %v1200
      %v1233 = vsub.f32 0.0, %v1201
      %v1234 = vsub.f32 0.0, %v1202
      %v1235 = vsub.f32 0.0, %v1203
      %v1236 = vsub.f32 0.0, %v1204
      %v1237 = vsub.f32 0.0, %v1205
      %v1238 = vsub.f32 0.0, %v1206
      %v1239 = vsub.f32 0.0, %v1207
      %v1240 = vsub.f32 0.0, %v1208
      %v1241 = vsub.f32 0.0, %v1209
      %v1242 = vsub.f32 0.0, %v1210
      %v1243 = vsub.f32 0.0, %v1211
      %v1244 = vsub.f32 0.0, %v1212
      %v1245 = vsub.f32 0.0, %v1213
      %v1246 = vsub.f32 0.0, %v1214
      %v1247 = vsub.f32 0.0, %v1215
      %v1248 = vsub.f32 0.0, %v1216
      %v1249 = vsub.f32 0.0, %v1217
      %v1250 = vsub.f32 0.0, %v1218
      %v1251 = vsub.f32 0.0, %v1219
      %v1252 = vsub.f32 0.0, %v1220
      %v1253 = vsub.f32 0.0, %v1221
      %v1254 = vsub.f32 0.0, %v1222
      %v1255 = vsub.f32 0.0, %v1223
      %v1256 = vsub.f32 0.0, %v1224
      %v1257 = vsub.f32 0.0, %v1225
      %v1258 = vsub.f32 0.0, %v1226
      %v1259 = vmul.f32 %v1227, 1.442695
      %v1260 = vpow.pop %v1259
      %v1261 = vmul.f32 %v1228, 1.442695
      %v1262 = vpow.pop %v1261
      %v1263 = vmul.f32 %v1229, 1.442695
      %v1264 = vpow.pop %v1263
      %v1265 = vmul.f32 %v1230, 1.442695
      %v1266 = vpow.pop %v1265
      %v1267 = vmul.f32 %v1231, 1.442695
      %v1268 = vpow.pop %v1267
      %v1269 = vmul.f32 %v1232, 1.442695
      %v1270 = vpow.pop %v1269
      %v1271 = vmul.f32 %v1233, 1.442695
      %v1272 = vpow.pop %v1271
      %v1273 = vmul.f32 %v1234, 1.442695
      %v1274 = vpow.pop %v1273
      %v1275 = vmul.f32 %v1235, 1.442695
      %v1276 = vpow.pop %v1275
      %v1277 = vmul.f32 %v1236, 1.442695
      %v1278 = vpow.pop %v1277
      %v1279 = vmul.f32 %v1237, 1.442695
      %v1280 = vpow.pop %v1279
      %v1281 = vmul.f32 %v1238, 1.442695
      %v1282 = vpow.pop %v1281
      %v1283 = vmul.f32 %v1239, 1.442695
      %v1284 = vpow.pop %v1283
      %v1285 = vmul.f32 %v1240, 1.442695
      %v1286 = vpow.pop %v1285
      %v1287 = vmul.f32 %v1241, 1.442695
      %v1288 = vpow.pop %v1287
      %v1289 = vmul.f32 %v1242, 1.442695
      %v1290 = vpow.pop %v1289
      %v1291 = vmul.f32 %v1243, 1.442695
      %v1292 = vpow.pop %v1291
      %v1293 = vmul.f32 %v1244, 1.442695
      %v1294 = vpow.pop %v1293
      %v1295 = vmul.f32 %v1245, 1.442695
      %v1296 = vpow.pop %v1295
      %v1297 = vmul.f32 %v1246, 1.442695
      %v1298 = vpow.pop %v1297
      %v1299 = vmul.f32 %v1247, 1.442695
      %v1300 = vpow.pop %v1299
      %v1301 = vmul.f32 %v1248, 1.442695
      %v1302 = vpow.pop %v1301
      %v1303 = vmul.f32 %v1249, 1.442695
      %v1304 = vpow.pop %v1303
      %v1305 = vmul.f32 %v1250, 1.442695
      %v1306 = vpow.pop %v1305
      %v1307 = vmul.f32 %v1251, 1.442695
      %v1308 = vpow.pop %v1307
      %v1309 = vmul.f32 %v1252, 1.442695
      %v1310 = vpow.pop %v1309
      %v1311 = vmul.f32 %v1253, 1.442695
      %v1312 = vpow.pop %v1311
      %v1313 = vmul.f32 %v1254, 1.442695
      %v1314 = vpow.pop %v1313
      %v1315 = vmul.f32 %v1255, 1.442695
      %v1316 = vpow.pop %v1315
      %v1317 = vmul.f32 %v1256, 1.442695
      %v1318 = vpow.pop %v1317
      %v1319 = vmul.f32 %v1257, 1.442695
      %v1320 = vpow.pop %v1319
      %v1321 = vmul.f32 %v1258, 1.442695
      %v1322 = vpow.pop %v1321
      %v1323 = vadd.f32 %v1260, 1.0
      %v1324 = vlog2.pop %v1323
      %v1325 = vmul.f32 %v1324, 0.6931472
      %v1326 = vmul.f32 -0.5, %v1260
      %v1327 = vadd.f32 %v1326, 1.0
      %v1328 = vmul.f32 %v1327, %v1260
      %v1329 = vand.u32 2147483647, %v1260
      %vm1330 = vcmp.lt.f32.partialorder %v1329, 0.0004427343
      %v1331 = vsel %vm1330, %v1328, %v1325
      %v1332 = vadd.f32 %v1262, 1.0
      %v1333 = vlog2.pop %v1332
      %v1334 = vmul.f32 %v1333, 0.6931472
      %v1335 = vmul.f32 -0.5, %v1262
      %v1336 = vadd.f32 %v1335, 1.0
      %v1337 = vmul.f32 %v1336, %v1262
      %v1338 = vand.u32 2147483647, %v1262
      %vm1339 = vcmp.lt.f32.partialorder %v1338, 0.0004427343
      %v1340 = vsel %vm1339, %v1337, %v1334
      %v1341 = vadd.f32 %v1264, 1.0
      %v1342 = vlog2.pop %v1341
      %v1343 = vmul.f32 %v1342, 0.6931472
      %v1344 = vmul.f32 -0.5, %v1264
      %v1345 = vadd.f32 %v1344, 1.0
      %v1346 = vmul.f32 %v1345, %v1264
      %v1347 = vand.u32 2147483647, %v1264
      %vm1348 = vcmp.lt.f32.partialorder %v1347, 0.0004427343
      %v1349 = vsel %vm1348, %v1346, %v1343
      %v1350 = vadd.f32 %v1266, 1.0
      %v1351 = vlog2.pop %v1350
      %v1352 = vmul.f32 %v1351, 0.6931472
      %v1353 = vmul.f32 -0.5, %v1266
      %v1354 = vadd.f32 %v1353, 1.0
      %v1355 = vmul.f32 %v1354, %v1266
      %v1356 = vand.u32 2147483647, %v1266
      %vm1357 = vcmp.lt.f32.partialorder %v1356, 0.0004427343
      %v1358 = vsel %vm1357, %v1355, %v1352
      %v1359 = vadd.f32 %v1268, 1.0
      %v1360 = vlog2.pop %v1359
      %v1361 = vmul.f32 %v1360, 0.6931472
      %v1362 = vmul.f32 -0.5, %v1268
      %v1363 = vadd.f32 %v1362, 1.0
      %v1364 = vmul.f32 %v1363, %v1268
      %v1365 = vand.u32 2147483647, %v1268
      %vm1366 = vcmp.lt.f32.partialorder %v1365, 0.0004427343
      %v1367 = vsel %vm1366, %v1364, %v1361
      %v1368 = vadd.f32 %v1270, 1.0
      %v1369 = vlog2.pop %v1368
      %v1370 = vmul.f32 %v1369, 0.6931472
      %v1371 = vmul.f32 -0.5, %v1270
      %v1372 = vadd.f32 %v1371, 1.0
      %v1373 = vmul.f32 %v1372, %v1270
      %v1374 = vand.u32 2147483647, %v1270
      %vm1375 = vcmp.lt.f32.partialorder %v1374, 0.0004427343
      %v1376 = vsel %vm1375, %v1373, %v1370
      %v1377 = vadd.f32 %v1272, 1.0
      %v1378 = vlog2.pop %v1377
      %v1379 = vmul.f32 %v1378, 0.6931472
      %v1380 = vmul.f32 -0.5, %v1272
      %v1381 = vadd.f32 %v1380, 1.0
      %v1382 = vmul.f32 %v1381, %v1272
      %v1383 = vand.u32 2147483647, %v1272
      %vm1384 = vcmp.lt.f32.partialorder %v1383, 0.0004427343
      %v1385 = vsel %vm1384, %v1382, %v1379
      %v1386 = vadd.f32 %v1274, 1.0
      %v1387 = vlog2.pop %v1386
      %v1388 = vmul.f32 %v1387, 0.6931472
      %v1389 = vmul.f32 -0.5, %v1274
      %v1390 = vadd.f32 %v1389, 1.0
      %v1391 = vmul.f32 %v1390, %v1274
      %v1392 = vand.u32 2147483647, %v1274
      %vm1393 = vcmp.lt.f32.partialorder %v1392, 0.0004427343
      %v1394 = vsel %vm1393, %v1391, %v1388
      %v1395 = vadd.f32 %v1276, 1.0
      %v1396 = vlog2.pop %v1395
      %v1397 = vmul.f32 %v1396, 0.6931472
      %v1398 = vmul.f32 -0.5, %v1276
      %v1399 = vadd.f32 %v1398, 1.0
      %v1400 = vmul.f32 %v1399, %v1276
      %v1401 = vand.u32 2147483647, %v1276
      %vm1402 = vcmp.lt.f32.partialorder %v1401, 0.0004427343
      %v1403 = vsel %vm1402, %v1400, %v1397
      %v1404 = vadd.f32 %v1278, 1.0
      %v1405 = vlog2.pop %v1404
      %v1406 = vmul.f32 %v1405, 0.6931472
      %v1407 = vmul.f32 -0.5, %v1278
      %v1408 = vadd.f32 %v1407, 1.0
      %v1409 = vmul.f32 %v1408, %v1278
      %v1410 = vand.u32 2147483647, %v1278
      %vm1411 = vcmp.lt.f32.partialorder %v1410, 0.0004427343
      %v1412 = vsel %vm1411, %v1409, %v1406
      %v1413 = vadd.f32 %v1280, 1.0
      %v1414 = vlog2.pop %v1413
      %v1415 = vmul.f32 %v1414, 0.6931472
      %v1416 = vmul.f32 -0.5, %v1280
      %v1417 = vadd.f32 %v1416, 1.0
      %v1418 = vmul.f32 %v1417, %v1280
      %v1419 = vand.u32 2147483647, %v1280
      %vm1420 = vcmp.lt.f32.partialorder %v1419, 0.0004427343
      %v1421 = vsel %vm1420, %v1418, %v1415
      %v1422 = vadd.f32 %v1282, 1.0
      %v1423 = vlog2.pop %v1422
      %v1424 = vmul.f32 %v1423, 0.6931472
      %v1425 = vmul.f32 -0.5, %v1282
      %v1426 = vadd.f32 %v1425, 1.0
      %v1427 = vmul.f32 %v1426, %v1282
      %v1428 = vand.u32 2147483647, %v1282
      %vm1429 = vcmp.lt.f32.partialorder %v1428, 0.0004427343
      %v1430 = vsel %vm1429, %v1427, %v1424
      %v1431 = vadd.f32 %v1284, 1.0
      %v1432 = vlog2.pop %v1431
      %v1433 = vmul.f32 %v1432, 0.6931472
      %v1434 = vmul.f32 -0.5, %v1284
      %v1435 = vadd.f32 %v1434, 1.0
      %v1436 = vmul.f32 %v1435, %v1284
      %v1437 = vand.u32 2147483647, %v1284
      %vm1438 = vcmp.lt.f32.partialorder %v1437, 0.0004427343
      %v1439 = vsel %vm1438, %v1436, %v1433
      %v1440 = vadd.f32 %v1286, 1.0
      %v1441 = vlog2.pop %v1440
      %v1442 = vmul.f32 %v1441, 0.6931472
      %v1443 = vmul.f32 -0.5, %v1286
      %v1444 = vadd.f32 %v1443, 1.0
      %v1445 = vmul.f32 %v1444, %v1286
      %v1446 = vand.u32 2147483647, %v1286
      %vm1447 = vcmp.lt.f32.partialorder %v1446, 0.0004427343
      %v1448 = vsel %vm1447, %v1445, %v1442
      %v1449 = vadd.f32 %v1288, 1.0
      %v1450 = vlog2.pop %v1449
      %v1451 = vmul.f32 %v1450, 0.6931472
      %v1452 = vmul.f32 -0.5, %v1288
      %v1453 = vadd.f32 %v1452, 1.0
      %v1454 = vmul.f32 %v1453, %v1288
      %v1455 = vand.u32 2147483647, %v1288
      %vm1456 = vcmp.lt.f32.partialorder %v1455, 0.0004427343
      %v1457 = vsel %vm1456, %v1454, %v1451
      %v1458 = vadd.f32 %v1290, 1.0
      %v1459 = vlog2.pop %v1458
      %v1460 = vmul.f32 %v1459, 0.6931472
      %v1461 = vmul.f32 -0.5, %v1290
      %v1462 = vadd.f32 %v1461, 1.0
      %v1463 = vmul.f32 %v1462, %v1290
      %v1464 = vand.u32 2147483647, %v1290
      %vm1465 = vcmp.lt.f32.partialorder %v1464, 0.0004427343
      %v1466 = vsel %vm1465, %v1463, %v1460
      %v1467 = vadd.f32 %v1292, 1.0
      %v1468 = vlog2.pop %v1467
      %v1469 = vmul.f32 %v1468, 0.6931472
      %v1470 = vmul.f32 -0.5, %v1292
      %v1471 = vadd.f32 %v1470, 1.0
      %v1472 = vmul.f32 %v1471, %v1292
      %v1473 = vand.u32 2147483647, %v1292
      %vm1474 = vcmp.lt.f32.partialorder %v1473, 0.0004427343
      %v1475 = vsel %vm1474, %v1472, %v1469
      %v1476 = vadd.f32 %v1294, 1.0
      %v1477 = vlog2.pop %v1476
      %v1478 = vmul.f32 %v1477, 0.6931472
      %v1479 = vmul.f32 -0.5, %v1294
      %v1480 = vadd.f32 %v1479, 1.0
      %v1481 = vmul.f32 %v1480, %v1294
      %v1482 = vand.u32 2147483647, %v1294
      %vm1483 = vcmp.lt.f32.partialorder %v1482, 0.0004427343
      %v1484 = vsel %vm1483, %v1481, %v1478
      %v1485 = vadd.f32 %v1296, 1.0
      %v1486 = vlog2.pop %v1485
      %v1487 = vmul.f32 %v1486, 0.6931472
      %v1488 = vmul.f32 -0.5, %v1296
      %v1489 = vadd.f32 %v1488, 1.0
      %v1490 = vmul.f32 %v1489, %v1296
      %v1491 = vand.u32 2147483647, %v1296
      %vm1492 = vcmp.lt.f32.partialorder %v1491, 0.0004427343
      %v1493 = vsel %vm1492, %v1490, %v1487
      %v1494 = vadd.f32 %v1298, 1.0
      %v1495 = vlog2.pop %v1494
      %v1496 = vmul.f32 %v1495, 0.6931472
      %v1497 = vmul.f32 -0.5, %v1298
      %v1498 = vadd.f32 %v1497, 1.0
      %v1499 = vmul.f32 %v1498, %v1298
      %v1500 = vand.u32 2147483647, %v1298
      %vm1501 = vcmp.lt.f32.partialorder %v1500, 0.0004427343
      %v1502 = vsel %vm1501, %v1499, %v1496
      %v1503 = vadd.f32 %v1300, 1.0
      %v1504 = vlog2.pop %v1503
      %v1505 = vmul.f32 %v1504, 0.6931472
      %v1506 = vmul.f32 -0.5, %v1300
      %v1507 = vadd.f32 %v1506, 1.0
      %v1508 = vmul.f32 %v1507, %v1300
      %v1509 = vand.u32 2147483647, %v1300
      %vm1510 = vcmp.lt.f32.partialorder %v1509, 0.0004427343
      %v1511 = vsel %vm1510, %v1508, %v1505
      %v1512 = vadd.f32 %v1302, 1.0
      %v1513 = vlog2.pop %v1512
      %v1514 = vmul.f32 %v1513, 0.6931472
      %v1515 = vmul.f32 -0.5, %v1302
      %v1516 = vadd.f32 %v1515, 1.0
      %v1517 = vmul.f32 %v1516, %v1302
      %v1518 = vand.u32 2147483647, %v1302
      %vm1519 = vcmp.lt.f32.partialorder %v1518, 0.0004427343
      %v1520 = vsel %vm1519, %v1517, %v1514
      %v1521 = vadd.f32 %v1304, 1.0
      %v1522 = vlog2.pop %v1521
      %v1523 = vmul.f32 %v1522, 0.6931472
      %v1524 = vmul.f32 -0.5, %v1304
      %v1525 = vadd.f32 %v1524, 1.0
      %v1526 = vmul.f32 %v1525, %v1304
      %v1527 = vand.u32 2147483647, %v1304
      %vm1528 = vcmp.lt.f32.partialorder %v1527, 0.0004427343
      %v1529 = vsel %vm1528, %v1526, %v1523
      %v1530 = vadd.f32 %v1306, 1.0
      %v1531 = vlog2.pop %v1530
      %v1532 = vmul.f32 %v1531, 0.6931472
      %v1533 = vmul.f32 -0.5, %v1306
      %v1534 = vadd.f32 %v1533, 1.0
      %v1535 = vmul.f32 %v1534, %v1306
      %v1536 = vand.u32 2147483647, %v1306
      %vm1537 = vcmp.lt.f32.partialorder %v1536, 0.0004427343
      %v1538 = vsel %vm1537, %v1535, %v1532
      %v1539 = vadd.f32 %v1308, 1.0
      %v1540 = vlog2.pop %v1539
      %v1541 = vmul.f32 %v1540, 0.6931472
      %v1542 = vmul.f32 -0.5, %v1308
      %v1543 = vadd.f32 %v1542, 1.0
      %v1544 = vmul.f32 %v1543, %v1308
      %v1545 = vand.u32 2147483647, %v1308
      %vm1546 = vcmp.lt.f32.partialorder %v1545, 0.0004427343
      %v1547 = vsel %vm1546, %v1544, %v1541
      %v1548 = vadd.f32 %v1310, 1.0
      %v1549 = vlog2.pop %v1548
      %v1550 = vmul.f32 %v1549, 0.6931472
      %v1551 = vmul.f32 -0.5, %v1310
      %v1552 = vadd.f32 %v1551, 1.0
      %v1553 = vmul.f32 %v1552, %v1310
      %v1554 = vand.u32 2147483647, %v1310
      %vm1555 = vcmp.lt.f32.partialorder %v1554, 0.0004427343
      %v1556 = vsel %vm1555, %v1553, %v1550
      %v1557 = vadd.f32 %v1312, 1.0
      %v1558 = vlog2.pop %v1557
      %v1559 = vmul.f32 %v1558, 0.6931472
      %v1560 = vmul.f32 -0.5, %v1312
      %v1561 = vadd.f32 %v1560, 1.0
      %v1562 = vmul.f32 %v1561, %v1312
      %v1563 = vand.u32 2147483647, %v1312
      %vm1564 = vcmp.lt.f32.partialorder %v1563, 0.0004427343
      %v1565 = vsel %vm1564, %v1562, %v1559
      %v1566 = vadd.f32 %v1314, 1.0
      %v1567 = vlog2.pop %v1566
      %v1568 = vmul.f32 %v1567, 0.6931472
      %v1569 = vmul.f32 -0.5, %v1314
      %v1570 = vadd.f32 %v1569, 1.0
      %v1571 = vmul.f32 %v1570, %v1314
      %v1572 = vand.u32 2147483647, %v1314
      %vm1573 = vcmp.lt.f32.partialorder %v1572, 0.0004427343
      %v1574 = vsel %vm1573, %v1571, %v1568
      %v1575 = vadd.f32 %v1316, 1.0
      %v1576 = vlog2.pop %v1575
      %v1577 = vmul.f32 %v1576, 0.6931472
      %v1578 = vmul.f32 -0.5, %v1316
      %v1579 = vadd.f32 %v1578, 1.0
      %v1580 = vmul.f32 %v1579, %v1316
      %v1581 = vand.u32 2147483647, %v1316
      %vm1582 = vcmp.lt.f32.partialorder %v1581, 0.0004427343
      %v1583 = vsel %vm1582, %v1580, %v1577
      %v1584 = vadd.f32 %v1318, 1.0
      %v1585 = vlog2.pop %v1584
      %v1586 = vmul.f32 %v1585, 0.6931472
      %v1587 = vmul.f32 -0.5, %v1318
      %v1588 = vadd.f32 %v1587, 1.0
      %v1589 = vmul.f32 %v1588, %v1318
      %v1590 = vand.u32 2147483647, %v1318
      %vm1591 = vcmp.lt.f32.partialorder %v1590, 0.0004427343
      %v1592 = vsel %vm1591, %v1589, %v1586
      %v1593 = vadd.f32 %v1320, 1.0
      %v1594 = vlog2.pop %v1593
      %v1595 = vmul.f32 %v1594, 0.6931472
      %v1596 = vmul.f32 -0.5, %v1320
      %v1597 = vadd.f32 %v1596, 1.0
      %v1598 = vmul.f32 %v1597, %v1320
      %v1599 = vand.u32 2147483647, %v1320
      %vm1600 = vcmp.lt.f32.partialorder %v1599, 0.0004427343
      %v1601 = vsel %vm1600, %v1598, %v1595
      %v1602 = vadd.f32 %v1322, 1.0
      %v1603 = vlog2.pop %v1602
      %v1604 = vmul.f32 %v1603, 0.6931472
      %v1605 = vmul.f32 -0.5, %v1322
      %v1606 = vadd.f32 %v1605, 1.0
      %v1607 = vmul.f32 %v1606, %v1322
      %v1608 = vand.u32 2147483647, %v1322
      %vm1609 = vcmp.lt.f32.partialorder %v1608, 0.0004427343
      %v1610 = vsel %vm1609, %v1607, %v1604
      %v1611 = vadd.f32 %v1099, %v1331
      %v1612 = vadd.f32 %v1100, %v1340
      %v1613 = vadd.f32 %v1101, %v1349
      %v1614 = vadd.f32 %v1102, %v1358
      %v1615 = vadd.f32 %v1103, %v1367
      %v1616 = vadd.f32 %v1104, %v1376
      %v1617 = vadd.f32 %v1105, %v1385
      %v1618 = vadd.f32 %v1106, %v1394
      %v1619 = vadd.f32 %v1107, %v1403
      %v1620 = vadd.f32 %v1108, %v1412
      %v1621 = vadd.f32 %v1109, %v1421
      %v1622 = vadd.f32 %v1110, %v1430
      %v1623 = vadd.f32 %v1111, %v1439
      %v1624 = vadd.f32 %v1112, %v1448
      %v1625 = vadd.f32 %v1113, %v1457
      %v1626 = vadd.f32 %v1114, %v1466
      %v1627 = vadd.f32 %v1115, %v1475
      %v1628 = vadd.f32 %v1116, %v1484
      %v1629 = vadd.f32 %v1117, %v1493
      %v1630 = vadd.f32 %v1118, %v1502
      %v1631 = vadd.f32 %v1119, %v1511
      %v1632 = vadd.f32 %v1120, %v1520
      %v1633 = vadd.f32 %v1121, %v1529
      %v1634 = vadd.f32 %v1122, %v1538
      %v1635 = vadd.f32 %v1123, %v1547
      %v1636 = vadd.f32 %v1124, %v1556
      %v1637 = vadd.f32 %v1125, %v1565
      %v1638 = vadd.f32 %v1126, %v1574
      %v1639 = vadd.f32 %v1127, %v1583
      %v1640 = vadd.f32 %v1128, %v1592
      %v1641 = vadd.f32 %v1129, %v1601
      %v1642 = vadd.f32 %v1130, %v1610
      %v1643 = vsel %vm1131, %v1163, %v1611
      %v1644 = vsel %vm1132, %v1164, %v1612
      %v1645 = vsel %vm1133, %v1165, %v1613
      %v1646 = vsel %vm1134, %v1166, %v1614
      %v1647 = vsel %vm1135, %v1167, %v1615
      %v1648 = vsel %vm1136, %v1168, %v1616
      %v1649 = vsel %vm1137, %v1169, %v1617
      %v1650 = vsel %vm1138, %v1170, %v1618
      %v1651 = vsel %vm1139, %v1171, %v1619
      %v1652 = vsel %vm1140, %v1172, %v1620
      %v1653 = vsel %vm1141, %v1173, %v1621
      %v1654 = vsel %vm1142, %v1174, %v1622
      %v1655 = vsel %vm1143, %v1175, %v1623
      %v1656 = vsel %vm1144, %v1176, %v1624
      %v1657 = vsel %vm1145, %v1177, %v1625
      %v1658 = vsel %vm1146, %v1178, %v1626
      %v1659 = vsel %vm1147, %v1179, %v1627
      %v1660 = vsel %vm1148, %v1180, %v1628
      %v1661 = vsel %vm1149, %v1181, %v1629
      %v1662 = vsel %vm1150, %v1182, %v1630
      %v1663 = vsel %vm1151, %v1183, %v1631
      %v1664 = vsel %vm1152, %v1184, %v1632
      %v1665 = vsel %vm1153, %v1185, %v1633
      %v1666 = vsel %vm1154, %v1186, %v1634
      %v1667 = vsel %vm1155, %v1187, %v1635
      %v1668 = vsel %vm1156, %v1188, %v1636
      %v1669 = vsel %vm1157, %v1189, %v1637
      %v1670 = vsel %vm1158, %v1190, %v1638
      %v1671 = vsel %vm1159, %v1191, %v1639
      %v1672 = vsel %vm1160, %v1192, %v1640
      %v1673 = vsel %vm1161, %v1193, %v1641
      %v1674 = vsel %vm1162, %v1194, %v1642
      %v1675 = vld [vmem:[%s3] sm:$0xff]
      %v1676 = vld [vmem:[%s3 + $0x8] sm:$0xff]
      %v1677 = vld [vmem:[%s3 + $0x10] sm:$0xff]
      %v1678 = vld [vmem:[%s3 + $0x18] sm:$0xff]
      %v1679 = vld [vmem:[%s3 + $0x20] sm:$0xff]
      %v1680 = vld [vmem:[%s3 + $0x28] sm:$0xff]
      %v1681 = vld [vmem:[%s3 + $0x30] sm:$0xff]
      %v1682 = vld [vmem:[%s3 + $0x38] sm:$0xff]
      %v1683 = vld [vmem:[%s4] sm:$0x1]
      %v1685 = vperm.slane %v1683, 0
      %vm1687 = vcmask 523264
      %v1689 = vsel %vm1687, %v1643, 0
      %v1692 = vsel %vm1687, %v1644, 0
      %v1695 = vsel %vm1687, %v1645, 0
      %v1698 = vsel %vm1687, %v1646, 0
      %v1701 = vsel %vm1687, %v1647, 0
      %v1704 = vsel %vm1687, %v1648, 0
      %v1707 = vsel %vm1687, %v1649, 0
      %v1710 = vsel %vm1687, %v1650, 0
      %v1713 = vsel %vm1687, %v1651, 0
      %v1716 = vsel %vm1687, %v1652, 0
      %v1719 = vsel %vm1687, %v1653, 0
      %v1722 = vsel %vm1687, %v1654, 0
      %v1725 = vsel %vm1687, %v1655, 0
      %v1728 = vsel %vm1687, %v1656, 0
      %v1731 = vsel %vm1687, %v1657, 0
      %v1734 = vsel %vm1687, %v1658, 0
      %v1737 = vsel %vm1687, %v1659, 0
      %v1740 = vsel %vm1687, %v1660, 0
      %v1743 = vsel %vm1687, %v1661, 0
      %v1746 = vsel %vm1687, %v1662, 0
      %v1749 = vsel %vm1687, %v1663, 0
      %v1752 = vsel %vm1687, %v1664, 0
      %v1755 = vsel %vm1687, %v1665, 0
      %v1758 = vsel %vm1687, %v1666, 0
      %v1761 = vsel %vm1687, %v1667, 0
      %v1764 = vsel %vm1687, %v1668, 0
      %v1767 = vsel %vm1687, %v1669, 0
      %v1770 = vsel %vm1687, %v1670, 0
      %v1773 = vsel %vm1687, %v1671, 0
      %v1776 = vsel %vm1687, %v1672, 0
      %v1779 = vsel %vm1687, %v1673, 0
      %v1782 = vsel %vm1687, %v1674, 0
      %1784 = vmatpush.msra.mxu0 0.0
      %1785 = vmatpush.msra.mxu0 0.0
      %1786 = vmatpush.msra.mxu0 0.0
      %1787 = vmatpush.msra.mxu0 0.0
      %1788 = vmatpush.msra.mxu0 0.0
      %1789 = vmatpush.msra.mxu0 0.0
      %1790 = vmatpush.msra.mxu0 0.0
      %1791 = vmatpush.msra.mxu0 0.0
      %1792 = vmatpush.msra.mxu0 %v1682
      %1793 = vmatpush.msra.mxu0 %v1681
      %1794 = vmatpush.msra.mxu0 %v1680
      %1795 = vmatpush.msra.mxu0 %v1679
      %1796 = vmatpush.msra.mxu0 %v1678
      %1797 = vmatpush.msra.mxu0 %v1677
      %1798 = vmatpush.msra.mxu0 %v1676
      %1799 = vmatpush.msra.mxu0 %v1675
      %1800 = vmatmul.f32.gmra.mxu0 %v1689
      %v1801 = vpop.f32.mrf.mxu0
      %v1802 = vadd.f32 %v1685, %v1801
      %1803 = vmatmul.f32.gmra.mxu0 %v1692
      %v1804 = vpop.f32.mrf.mxu0
      %v1805 = vadd.f32 %v1685, %v1804
      %1806 = vmatmul.f32.gmra.mxu0 %v1695
      %v1807 = vpop.f32.mrf.mxu0
      %v1808 = vadd.f32 %v1685, %v1807
      %1809 = vmatmul.f32.gmra.mxu0 %v1698
      %v1810 = vpop.f32.mrf.mxu0
      %v1811 = vadd.f32 %v1685, %v1810
      %1812 = vmatmul.f32.gmra.mxu0 %v1701
      %v1813 = vpop.f32.mrf.mxu0
      %v1814 = vadd.f32 %v1685, %v1813
      %1815 = vmatmul.f32.gmra.mxu0 %v1704
      %v1816 = vpop.f32.mrf.mxu0
      %v1817 = vadd.f32 %v1685, %v1816
      %1818 = vmatmul.f32.gmra.mxu0 %v1707
      %v1819 = vpop.f32.mrf.mxu0
      %v1820 = vadd.f32 %v1685, %v1819
      %1821 = vmatmul.f32.gmra.mxu0 %v1710
      %v1822 = vpop.f32.mrf.mxu0
      %v1823 = vadd.f32 %v1685, %v1822
      %1824 = vmatmul.f32.gmra.mxu0 %v1713
      %v1825 = vpop.f32.mrf.mxu0
      %v1826 = vadd.f32 %v1685, %v1825
      %1827 = vmatmul.f32.gmra.mxu0 %v1716
      %v1828 = vpop.f32.mrf.mxu0
      %v1829 = vadd.f32 %v1685, %v1828
      %1830 = vmatmul.f32.gmra.mxu0 %v1719
      %v1831 = vpop.f32.mrf.mxu0
      %v1832 = vadd.f32 %v1685, %v1831
      %1833 = vmatmul.f32.gmra.mxu0 %v1722
      %v1834 = vpop.f32.mrf.mxu0
      %v1835 = vadd.f32 %v1685, %v1834
      %1836 = vmatmul.f32.gmra.mxu0 %v1725
      %v1837 = vpop.f32.mrf.mxu0
      %v1838 = vadd.f32 %v1685, %v1837
      %1839 = vmatmul.f32.gmra.mxu0 %v1728
      %v1840 = vpop.f32.mrf.mxu0
      %v1841 = vadd.f32 %v1685, %v1840
      %1842 = vmatmul.f32.gmra.mxu0 %v1731
      %v1843 = vpop.f32.mrf.mxu0
      %v1844 = vadd.f32 %v1685, %v1843
      %1845 = vmatmul.f32.gmra.mxu0 %v1734
      %v1846 = vpop.f32.mrf.mxu0
      %v1847 = vadd.f32 %v1685, %v1846
      %1848 = vmatmul.f32.gmra.mxu0 %v1737
      %v1849 = vpop.f32.mrf.mxu0
      %v1850 = vadd.f32 %v1685, %v1849
      %1851 = vmatmul.f32.gmra.mxu0 %v1740
      %v1852 = vpop.f32.mrf.mxu0
      %v1853 = vadd.f32 %v1685, %v1852
      %1854 = vmatmul.f32.gmra.mxu0 %v1743
      %v1855 = vpop.f32.mrf.mxu0
      %v1856 = vadd.f32 %v1685, %v1855
      %1857 = vmatmul.f32.gmra.mxu0 %v1746
      %v1858 = vpop.f32.mrf.mxu0
      %v1859 = vadd.f32 %v1685, %v1858
      %1860 = vmatmul.f32.gmra.mxu0 %v1749
      %v1861 = vpop.f32.mrf.mxu0
      %v1862 = vadd.f32 %v1685, %v1861
      %1863 = vmatmul.f32.gmra.mxu0 %v1752
      %v1864 = vpop.f32.mrf.mxu0
      %v1865 = vadd.f32 %v1685, %v1864
      %1866 = vmatmul.f32.gmra.mxu0 %v1755
      %v1867 = vpop.f32.mrf.mxu0
      %v1868 = vadd.f32 %v1685, %v1867
      %1869 = vmatmul.f32.gmra.mxu0 %v1758
      %v1870 = vpop.f32.mrf.mxu0
      %v1871 = vadd.f32 %v1685, %v1870
      %1872 = vmatmul.f32.gmra.mxu0 %v1761
      %v1873 = vpop.f32.mrf.mxu0
      %v1874 = vadd.f32 %v1685, %v1873
      %1875 = vmatmul.f32.gmra.mxu0 %v1764
      %v1876 = vpop.f32.mrf.mxu0
      %v1877 = vadd.f32 %v1685, %v1876
      %1878 = vmatmul.f32.gmra.mxu0 %v1767
      %v1879 = vpop.f32.mrf.mxu0
      %v1880 = vadd.f32 %v1685, %v1879
      %1881 = vmatmul.f32.gmra.mxu0 %v1770
      %v1882 = vpop.f32.mrf.mxu0
      %v1883 = vadd.f32 %v1685, %v1882
      %1884 = vmatmul.f32.gmra.mxu0 %v1773
      %v1885 = vpop.f32.mrf.mxu0
      %v1886 = vadd.f32 %v1685, %v1885
      %1887 = vmatmul.f32.gmra.mxu0 %v1776
      %v1888 = vpop.f32.mrf.mxu0
      %v1889 = vadd.f32 %v1685, %v1888
      %1890 = vmatmul.f32.gmra.mxu0 %v1779
      %v1891 = vpop.f32.mrf.mxu0
      %v1892 = vadd.f32 %v1685, %v1891
      %1893 = vmatmul.f32.gmra.mxu0 %v1782
      %v1894 = vpop.f32.mrf.mxu0
      %v1895 = vadd.f32 %v1685, %v1894
      %1896 = vdwg.mxu0
      %v1897 = vxor.u32 %v1802, 2147483648
      %v1898 = vxor.u32 %v1805, 2147483648
      %v1899 = vxor.u32 %v1808, 2147483648
      %v1900 = vxor.u32 %v1811, 2147483648
      %v1901 = vxor.u32 %v1814, 2147483648
      %v1902 = vxor.u32 %v1817, 2147483648
      %v1903 = vxor.u32 %v1820, 2147483648
      %v1904 = vxor.u32 %v1823, 2147483648
      %v1905 = vxor.u32 %v1826, 2147483648
      %v1906 = vxor.u32 %v1829, 2147483648
      %v1907 = vxor.u32 %v1832, 2147483648
      %v1908 = vxor.u32 %v1835, 2147483648
      %v1909 = vxor.u32 %v1838, 2147483648
      %v1910 = vxor.u32 %v1841, 2147483648
      %v1911 = vxor.u32 %v1844, 2147483648
      %v1912 = vxor.u32 %v1847, 2147483648
      %v1913 = vxor.u32 %v1850, 2147483648
      %v1914 = vxor.u32 %v1853, 2147483648
      %v1915 = vxor.u32 %v1856, 2147483648
      %v1916 = vxor.u32 %v1859, 2147483648
      %v1917 = vxor.u32 %v1862, 2147483648
      %v1918 = vxor.u32 %v1865, 2147483648
      %v1919 = vxor.u32 %v1868, 2147483648
      %v1920 = vxor.u32 %v1871, 2147483648
      %v1921 = vxor.u32 %v1874, 2147483648
      %v1922 = vxor.u32 %v1877, 2147483648
      %v1923 = vxor.u32 %v1880, 2147483648
      %v1924 = vxor.u32 %v1883, 2147483648
      %v1925 = vxor.u32 %v1886, 2147483648
      %v1926 = vxor.u32 %v1889, 2147483648
      %v1927 = vxor.u32 %v1892, 2147483648
      %v1928 = vxor.u32 %v1895, 2147483648
      %v1929 = vmul.f32 %v1897, 1.442695
      %v1930 = vpow.pop %v1929
      %v1931 = vmul.f32 %v1898, 1.442695
      %v1932 = vpow.pop %v1931
      %v1933 = vmul.f32 %v1899, 1.442695
      %v1934 = vpow.pop %v1933
      %v1935 = vmul.f32 %v1900, 1.442695
      %v1936 = vpow.pop %v1935
      %v1937 = vmul.f32 %v1901, 1.442695
      %v1938 = vpow.pop %v1937
      %v1939 = vmul.f32 %v1902, 1.442695
      %v1940 = vpow.pop %v1939
      %v1941 = vmul.f32 %v1903, 1.442695
      %v1942 = vpow.pop %v1941
      %v1943 = vmul.f32 %v1904, 1.442695
      %v1944 = vpow.pop %v1943
      %v1945 = vmul.f32 %v1905, 1.442695
      %v1946 = vpow.pop %v1945
      %v1947 = vmul.f32 %v1906, 1.442695
      %v1948 = vpow.pop %v1947
      %v1949 = vmul.f32 %v1907, 1.442695
      %v1950 = vpow.pop %v1949
      %v1951 = vmul.f32 %v1908, 1.442695
      %v1952 = vpow.pop %v1951
      %v1953 = vmul.f32 %v1909, 1.442695
      %v1954 = vpow.pop %v1953
      %v1955 = vmul.f32 %v1910, 1.442695
      %v1956 = vpow.pop %v1955
      %v1957 = vmul.f32 %v1911, 1.442695
      %v1958 = vpow.pop %v1957
      %v1959 = vmul.f32 %v1912, 1.442695
      %v1960 = vpow.pop %v1959
      %v1961 = vmul.f32 %v1913, 1.442695
      %v1962 = vpow.pop %v1961
      %v1963 = vmul.f32 %v1914, 1.442695
      %v1964 = vpow.pop %v1963
      %v1965 = vmul.f32 %v1915, 1.442695
      %v1966 = vpow.pop %v1965
      %v1967 = vmul.f32 %v1916, 1.442695
      %v1968 = vpow.pop %v1967
      %v1969 = vmul.f32 %v1917, 1.442695
      %v1970 = vpow.pop %v1969
      %v1971 = vmul.f32 %v1918, 1.442695
      %v1972 = vpow.pop %v1971
      %v1973 = vmul.f32 %v1919, 1.442695
      %v1974 = vpow.pop %v1973
      %v1975 = vmul.f32 %v1920, 1.442695
      %v1976 = vpow.pop %v1975
      %v1977 = vmul.f32 %v1921, 1.442695
      %v1978 = vpow.pop %v1977
      %v1979 = vmul.f32 %v1922, 1.442695
      %v1980 = vpow.pop %v1979
      %v1981 = vmul.f32 %v1923, 1.442695
      %v1982 = vpow.pop %v1981
      %v1983 = vmul.f32 %v1924, 1.442695
      %v1984 = vpow.pop %v1983
      %v1985 = vmul.f32 %v1925, 1.442695
      %v1986 = vpow.pop %v1985
      %v1987 = vmul.f32 %v1926, 1.442695
      %v1988 = vpow.pop %v1987
      %v1989 = vmul.f32 %v1927, 1.442695
      %v1990 = vpow.pop %v1989
      %v1991 = vmul.f32 %v1928, 1.442695
      %v1992 = vpow.pop %v1991
      %v1993 = vadd.f32 %v1930, 1.0
      %v1994 = vadd.f32 %v1932, 1.0
      %v1995 = vadd.f32 %v1934, 1.0
      %v1996 = vadd.f32 %v1936, 1.0
      %v1997 = vadd.f32 %v1938, 1.0
      %v1998 = vadd.f32 %v1940, 1.0
      %v1999 = vadd.f32 %v1942, 1.0
      %v2000 = vadd.f32 %v1944, 1.0
      %v2001 = vadd.f32 %v1946, 1.0
      %v2002 = vadd.f32 %v1948, 1.0
      %v2003 = vadd.f32 %v1950, 1.0
      %v2004 = vadd.f32 %v1952, 1.0
      %v2005 = vadd.f32 %v1954, 1.0
      %v2006 = vadd.f32 %v1956, 1.0
      %v2007 = vadd.f32 %v1958, 1.0
      %v2008 = vadd.f32 %v1960, 1.0
      %v2009 = vadd.f32 %v1962, 1.0
      %v2010 = vadd.f32 %v1964, 1.0
      %v2011 = vadd.f32 %v1966, 1.0
      %v2012 = vadd.f32 %v1968, 1.0
      %v2013 = vadd.f32 %v1970, 1.0
      %v2014 = vadd.f32 %v1972, 1.0
      %v2015 = vadd.f32 %v1974, 1.0
      %v2016 = vadd.f32 %v1976, 1.0
      %v2017 = vadd.f32 %v1978, 1.0
      %v2018 = vadd.f32 %v1980, 1.0
      %v2019 = vadd.f32 %v1982, 1.0
      %v2020 = vadd.f32 %v1984, 1.0
      %v2021 = vadd.f32 %v1986, 1.0
      %v2022 = vadd.f32 %v1988, 1.0
      %v2023 = vadd.f32 %v1990, 1.0
      %v2024 = vadd.f32 %v1992, 1.0
      %v2025 = vrcp.pop %v1993
      %v2026 = vmul.f32 %v1993, %v2025
      %v2027 = vsub.f32 1.0, %v2026
      %v2028 = vmul.f32 %v2025, %v2027
      %v2029 = vadd.f32 %v2025, %v2028
      %vm2030 = vweird.f32 %v1993
      %vm2031 = vweird.f32 %v2025
      %vm2032 = vmor %vm2030, %vm2031
      %v2033 = vsel %vm2032, %v2025, %v2029
      %v2034 = vand.u32 2147483647, %v1993
      %vm2035 = vcmp.eq.f32.partialorder %v2034, 8.507059e+37
      %v2036 = vand.u32 %v1993, 2147483648
      %v2037 = vor.u32 1.1754944e-38, %v2036
      %v2038 = vsel %vm2035, %v2037, %v2033
      %v2039 = vmul.f32 1.0, %v2038
      %v2040 = vrcp.pop %v1994
      %v2041 = vmul.f32 %v1994, %v2040
      %v2042 = vsub.f32 1.0, %v2041
      %v2043 = vmul.f32 %v2040, %v2042
      %v2044 = vadd.f32 %v2040, %v2043
      %vm2045 = vweird.f32 %v1994
      %vm2046 = vweird.f32 %v2040
      %vm2047 = vmor %vm2045, %vm2046
      %v2048 = vsel %vm2047, %v2040, %v2044
      %v2049 = vand.u32 2147483647, %v1994
      %vm2050 = vcmp.eq.f32.partialorder %v2049, 8.507059e+37
      %v2051 = vand.u32 %v1994, 2147483648
      %v2052 = vor.u32 1.1754944e-38, %v2051
      %v2053 = vsel %vm2050, %v2052, %v2048
      %v2054 = vmul.f32 1.0, %v2053
      %v2055 = vrcp.pop %v1995
      %v2056 = vmul.f32 %v1995, %v2055
      %v2057 = vsub.f32 1.0, %v2056
      %v2058 = vmul.f32 %v2055, %v2057
      %v2059 = vadd.f32 %v2055, %v2058
      %vm2060 = vweird.f32 %v1995
      %vm2061 = vweird.f32 %v2055
      %vm2062 = vmor %vm2060, %vm2061
      %v2063 = vsel %vm2062, %v2055, %v2059
      %v2064 = vand.u32 2147483647, %v1995
      %vm2065 = vcmp.eq.f32.partialorder %v2064, 8.507059e+37
      %v2066 = vand.u32 %v1995, 2147483648
      %v2067 = vor.u32 1.1754944e-38, %v2066
      %v2068 = vsel %vm2065, %v2067, %v2063
      %v2069 = vmul.f32 1.0, %v2068
      %v2070 = vrcp.pop %v1996
      %v2071 = vmul.f32 %v1996, %v2070
      %v2072 = vsub.f32 1.0, %v2071
      %v2073 = vmul.f32 %v2070, %v2072
      %v2074 = vadd.f32 %v2070, %v2073
      %vm2075 = vweird.f32 %v1996
      %vm2076 = vweird.f32 %v2070
      %vm2077 = vmor %vm2075, %vm2076
      %v2078 = vsel %vm2077, %v2070, %v2074
      %v2079 = vand.u32 2147483647, %v1996
      %vm2080 = vcmp.eq.f32.partialorder %v2079, 8.507059e+37
      %v2081 = vand.u32 %v1996, 2147483648
      %v2082 = vor.u32 1.1754944e-38, %v2081
      %v2083 = vsel %vm2080, %v2082, %v2078
      %v2084 = vmul.f32 1.0, %v2083
      %v2085 = vrcp.pop %v1997
      %v2086 = vmul.f32 %v1997, %v2085
      %v2087 = vsub.f32 1.0, %v2086
      %v2088 = vmul.f32 %v2085, %v2087
      %v2089 = vadd.f32 %v2085, %v2088
      %vm2090 = vweird.f32 %v1997
      %vm2091 = vweird.f32 %v2085
      %vm2092 = vmor %vm2090, %vm2091
      %v2093 = vsel %vm2092, %v2085, %v2089
      %v2094 = vand.u32 2147483647, %v1997
      %vm2095 = vcmp.eq.f32.partialorder %v2094, 8.507059e+37
      %v2096 = vand.u32 %v1997, 2147483648
      %v2097 = vor.u32 1.1754944e-38, %v2096
      %v2098 = vsel %vm2095, %v2097, %v2093
      %v2099 = vmul.f32 1.0, %v2098
      %v2100 = vrcp.pop %v1998
      %v2101 = vmul.f32 %v1998, %v2100
      %v2102 = vsub.f32 1.0, %v2101
      %v2103 = vmul.f32 %v2100, %v2102
      %v2104 = vadd.f32 %v2100, %v2103
      %vm2105 = vweird.f32 %v1998
      %vm2106 = vweird.f32 %v2100
      %vm2107 = vmor %vm2105, %vm2106
      %v2108 = vsel %vm2107, %v2100, %v2104
      %v2109 = vand.u32 2147483647, %v1998
      %vm2110 = vcmp.eq.f32.partialorder %v2109, 8.507059e+37
      %v2111 = vand.u32 %v1998, 2147483648
      %v2112 = vor.u32 1.1754944e-38, %v2111
      %v2113 = vsel %vm2110, %v2112, %v2108
      %v2114 = vmul.f32 1.0, %v2113
      %v2115 = vrcp.pop %v1999
      %v2116 = vmul.f32 %v1999, %v2115
      %v2117 = vsub.f32 1.0, %v2116
      %v2118 = vmul.f32 %v2115, %v2117
      %v2119 = vadd.f32 %v2115, %v2118
      %vm2120 = vweird.f32 %v1999
      %vm2121 = vweird.f32 %v2115
      %vm2122 = vmor %vm2120, %vm2121
      %v2123 = vsel %vm2122, %v2115, %v2119
      %v2124 = vand.u32 2147483647, %v1999
      %vm2125 = vcmp.eq.f32.partialorder %v2124, 8.507059e+37
      %v2126 = vand.u32 %v1999, 2147483648
      %v2127 = vor.u32 1.1754944e-38, %v2126
      %v2128 = vsel %vm2125, %v2127, %v2123
      %v2129 = vmul.f32 1.0, %v2128
      %v2130 = vrcp.pop %v2000
      %v2131 = vmul.f32 %v2000, %v2130
      %v2132 = vsub.f32 1.0, %v2131
      %v2133 = vmul.f32 %v2130, %v2132
      %v2134 = vadd.f32 %v2130, %v2133
      %vm2135 = vweird.f32 %v2000
      %vm2136 = vweird.f32 %v2130
      %vm2137 = vmor %vm2135, %vm2136
      %v2138 = vsel %vm2137, %v2130, %v2134
      %v2139 = vand.u32 2147483647, %v2000
      %vm2140 = vcmp.eq.f32.partialorder %v2139, 8.507059e+37
      %v2141 = vand.u32 %v2000, 2147483648
      %v2142 = vor.u32 1.1754944e-38, %v2141
      %v2143 = vsel %vm2140, %v2142, %v2138
      %v2144 = vmul.f32 1.0, %v2143
      %v2145 = vrcp.pop %v2001
      %v2146 = vmul.f32 %v2001, %v2145
      %v2147 = vsub.f32 1.0, %v2146
      %v2148 = vmul.f32 %v2145, %v2147
      %v2149 = vadd.f32 %v2145, %v2148
      %vm2150 = vweird.f32 %v2001
      %vm2151 = vweird.f32 %v2145
      %vm2152 = vmor %vm2150, %vm2151
      %v2153 = vsel %vm2152, %v2145, %v2149
      %v2154 = vand.u32 2147483647, %v2001
      %vm2155 = vcmp.eq.f32.partialorder %v2154, 8.507059e+37
      %v2156 = vand.u32 %v2001, 2147483648
      %v2157 = vor.u32 1.1754944e-38, %v2156
      %v2158 = vsel %vm2155, %v2157, %v2153
      %v2159 = vmul.f32 1.0, %v2158
      %v2160 = vrcp.pop %v2002
      %v2161 = vmul.f32 %v2002, %v2160
      %v2162 = vsub.f32 1.0, %v2161
      %v2163 = vmul.f32 %v2160, %v2162
      %v2164 = vadd.f32 %v2160, %v2163
      %vm2165 = vweird.f32 %v2002
      %vm2166 = vweird.f32 %v2160
      %vm2167 = vmor %vm2165, %vm2166
      %v2168 = vsel %vm2167, %v2160, %v2164
      %v2169 = vand.u32 2147483647, %v2002
      %vm2170 = vcmp.eq.f32.partialorder %v2169, 8.507059e+37
      %v2171 = vand.u32 %v2002, 2147483648
      %v2172 = vor.u32 1.1754944e-38, %v2171
      %v2173 = vsel %vm2170, %v2172, %v2168
      %v2174 = vmul.f32 1.0, %v2173
      %v2175 = vrcp.pop %v2003
      %v2176 = vmul.f32 %v2003, %v2175
      %v2177 = vsub.f32 1.0, %v2176
      %v2178 = vmul.f32 %v2175, %v2177
      %v2179 = vadd.f32 %v2175, %v2178
      %vm2180 = vweird.f32 %v2003
      %vm2181 = vweird.f32 %v2175
      %vm2182 = vmor %vm2180, %vm2181
      %v2183 = vsel %vm2182, %v2175, %v2179
      %v2184 = vand.u32 2147483647, %v2003
      %vm2185 = vcmp.eq.f32.partialorder %v2184, 8.507059e+37
      %v2186 = vand.u32 %v2003, 2147483648
      %v2187 = vor.u32 1.1754944e-38, %v2186
      %v2188 = vsel %vm2185, %v2187, %v2183
      %v2189 = vmul.f32 1.0, %v2188
      %v2190 = vrcp.pop %v2004
      %v2191 = vmul.f32 %v2004, %v2190
      %v2192 = vsub.f32 1.0, %v2191
      %v2193 = vmul.f32 %v2190, %v2192
      %v2194 = vadd.f32 %v2190, %v2193
      %vm2195 = vweird.f32 %v2004
      %vm2196 = vweird.f32 %v2190
      %vm2197 = vmor %vm2195, %vm2196
      %v2198 = vsel %vm2197, %v2190, %v2194
      %v2199 = vand.u32 2147483647, %v2004
      %vm2200 = vcmp.eq.f32.partialorder %v2199, 8.507059e+37
      %v2201 = vand.u32 %v2004, 2147483648
      %v2202 = vor.u32 1.1754944e-38, %v2201
      %v2203 = vsel %vm2200, %v2202, %v2198
      %v2204 = vmul.f32 1.0, %v2203
      %v2205 = vrcp.pop %v2005
      %v2206 = vmul.f32 %v2005, %v2205
      %v2207 = vsub.f32 1.0, %v2206
      %v2208 = vmul.f32 %v2205, %v2207
      %v2209 = vadd.f32 %v2205, %v2208
      %vm2210 = vweird.f32 %v2005
      %vm2211 = vweird.f32 %v2205
      %vm2212 = vmor %vm2210, %vm2211
      %v2213 = vsel %vm2212, %v2205, %v2209
      %v2214 = vand.u32 2147483647, %v2005
      %vm2215 = vcmp.eq.f32.partialorder %v2214, 8.507059e+37
      %v2216 = vand.u32 %v2005, 2147483648
      %v2217 = vor.u32 1.1754944e-38, %v2216
      %v2218 = vsel %vm2215, %v2217, %v2213
      %v2219 = vmul.f32 1.0, %v2218
      %v2220 = vrcp.pop %v2006
      %v2221 = vmul.f32 %v2006, %v2220
      %v2222 = vsub.f32 1.0, %v2221
      %v2223 = vmul.f32 %v2220, %v2222
      %v2224 = vadd.f32 %v2220, %v2223
      %vm2225 = vweird.f32 %v2006
      %vm2226 = vweird.f32 %v2220
      %vm2227 = vmor %vm2225, %vm2226
      %v2228 = vsel %vm2227, %v2220, %v2224
      %v2229 = vand.u32 2147483647, %v2006
      %vm2230 = vcmp.eq.f32.partialorder %v2229, 8.507059e+37
      %v2231 = vand.u32 %v2006, 2147483648
      %v2232 = vor.u32 1.1754944e-38, %v2231
      %v2233 = vsel %vm2230, %v2232, %v2228
      %v2234 = vmul.f32 1.0, %v2233
      %v2235 = vrcp.pop %v2007
      %v2236 = vmul.f32 %v2007, %v2235
      %v2237 = vsub.f32 1.0, %v2236
      %v2238 = vmul.f32 %v2235, %v2237
      %v2239 = vadd.f32 %v2235, %v2238
      %vm2240 = vweird.f32 %v2007
      %vm2241 = vweird.f32 %v2235
      %vm2242 = vmor %vm2240, %vm2241
      %v2243 = vsel %vm2242, %v2235, %v2239
      %v2244 = vand.u32 2147483647, %v2007
      %vm2245 = vcmp.eq.f32.partialorder %v2244, 8.507059e+37
      %v2246 = vand.u32 %v2007, 2147483648
      %v2247 = vor.u32 1.1754944e-38, %v2246
      %v2248 = vsel %vm2245, %v2247, %v2243
      %v2249 = vmul.f32 1.0, %v2248
      %v2250 = vrcp.pop %v2008
      %v2251 = vmul.f32 %v2008, %v2250
      %v2252 = vsub.f32 1.0, %v2251
      %v2253 = vmul.f32 %v2250, %v2252
      %v2254 = vadd.f32 %v2250, %v2253
      %vm2255 = vweird.f32 %v2008
      %vm2256 = vweird.f32 %v2250
      %vm2257 = vmor %vm2255, %vm2256
      %v2258 = vsel %vm2257, %v2250, %v2254
      %v2259 = vand.u32 2147483647, %v2008
      %vm2260 = vcmp.eq.f32.partialorder %v2259, 8.507059e+37
      %v2261 = vand.u32 %v2008, 2147483648
      %v2262 = vor.u32 1.1754944e-38, %v2261
      %v2263 = vsel %vm2260, %v2262, %v2258
      %v2264 = vmul.f32 1.0, %v2263
      %v2265 = vrcp.pop %v2009
      %v2266 = vmul.f32 %v2009, %v2265
      %v2267 = vsub.f32 1.0, %v2266
      %v2268 = vmul.f32 %v2265, %v2267
      %v2269 = vadd.f32 %v2265, %v2268
      %vm2270 = vweird.f32 %v2009
      %vm2271 = vweird.f32 %v2265
      %vm2272 = vmor %vm2270, %vm2271
      %v2273 = vsel %vm2272, %v2265, %v2269
      %v2274 = vand.u32 2147483647, %v2009
      %vm2275 = vcmp.eq.f32.partialorder %v2274, 8.507059e+37
      %v2276 = vand.u32 %v2009, 2147483648
      %v2277 = vor.u32 1.1754944e-38, %v2276
      %v2278 = vsel %vm2275, %v2277, %v2273
      %v2279 = vmul.f32 1.0, %v2278
      %v2280 = vrcp.pop %v2010
      %v2281 = vmul.f32 %v2010, %v2280
      %v2282 = vsub.f32 1.0, %v2281
      %v2283 = vmul.f32 %v2280, %v2282
      %v2284 = vadd.f32 %v2280, %v2283
      %vm2285 = vweird.f32 %v2010
      %vm2286 = vweird.f32 %v2280
      %vm2287 = vmor %vm2285, %vm2286
      %v2288 = vsel %vm2287, %v2280, %v2284
      %v2289 = vand.u32 2147483647, %v2010
      %vm2290 = vcmp.eq.f32.partialorder %v2289, 8.507059e+37
      %v2291 = vand.u32 %v2010, 2147483648
      %v2292 = vor.u32 1.1754944e-38, %v2291
      %v2293 = vsel %vm2290, %v2292, %v2288
      %v2294 = vmul.f32 1.0, %v2293
      %v2295 = vrcp.pop %v2011
      %v2296 = vmul.f32 %v2011, %v2295
      %v2297 = vsub.f32 1.0, %v2296
      %v2298 = vmul.f32 %v2295, %v2297
      %v2299 = vadd.f32 %v2295, %v2298
      %vm2300 = vweird.f32 %v2011
      %vm2301 = vweird.f32 %v2295
      %vm2302 = vmor %vm2300, %vm2301
      %v2303 = vsel %vm2302, %v2295, %v2299
      %v2304 = vand.u32 2147483647, %v2011
      %vm2305 = vcmp.eq.f32.partialorder %v2304, 8.507059e+37
      %v2306 = vand.u32 %v2011, 2147483648
      %v2307 = vor.u32 1.1754944e-38, %v2306
      %v2308 = vsel %vm2305, %v2307, %v2303
      %v2309 = vmul.f32 1.0, %v2308
      %v2310 = vrcp.pop %v2012
      %v2311 = vmul.f32 %v2012, %v2310
      %v2312 = vsub.f32 1.0, %v2311
      %v2313 = vmul.f32 %v2310, %v2312
      %v2314 = vadd.f32 %v2310, %v2313
      %vm2315 = vweird.f32 %v2012
      %vm2316 = vweird.f32 %v2310
      %vm2317 = vmor %vm2315, %vm2316
      %v2318 = vsel %vm2317, %v2310, %v2314
      %v2319 = vand.u32 2147483647, %v2012
      %vm2320 = vcmp.eq.f32.partialorder %v2319, 8.507059e+37
      %v2321 = vand.u32 %v2012, 2147483648
      %v2322 = vor.u32 1.1754944e-38, %v2321
      %v2323 = vsel %vm2320, %v2322, %v2318
      %v2324 = vmul.f32 1.0, %v2323
      %v2325 = vrcp.pop %v2013
      %v2326 = vmul.f32 %v2013, %v2325
      %v2327 = vsub.f32 1.0, %v2326
      %v2328 = vmul.f32 %v2325, %v2327
      %v2329 = vadd.f32 %v2325, %v2328
      %vm2330 = vweird.f32 %v2013
      %vm2331 = vweird.f32 %v2325
      %vm2332 = vmor %vm2330, %vm2331
      %v2333 = vsel %vm2332, %v2325, %v2329
      %v2334 = vand.u32 2147483647, %v2013
      %vm2335 = vcmp.eq.f32.partialorder %v2334, 8.507059e+37
      %v2336 = vand.u32 %v2013, 2147483648
      %v2337 = vor.u32 1.1754944e-38, %v2336
      %v2338 = vsel %vm2335, %v2337, %v2333
      %v2339 = vmul.f32 1.0, %v2338
      %v2340 = vrcp.pop %v2014
      %v2341 = vmul.f32 %v2014, %v2340
      %v2342 = vsub.f32 1.0, %v2341
      %v2343 = vmul.f32 %v2340, %v2342
      %v2344 = vadd.f32 %v2340, %v2343
      %vm2345 = vweird.f32 %v2014
      %vm2346 = vweird.f32 %v2340
      %vm2347 = vmor %vm2345, %vm2346
      %v2348 = vsel %vm2347, %v2340, %v2344
      %v2349 = vand.u32 2147483647, %v2014
      %vm2350 = vcmp.eq.f32.partialorder %v2349, 8.507059e+37
      %v2351 = vand.u32 %v2014, 2147483648
      %v2352 = vor.u32 1.1754944e-38, %v2351
      %v2353 = vsel %vm2350, %v2352, %v2348
      %v2354 = vmul.f32 1.0, %v2353
      %v2355 = vrcp.pop %v2015
      %v2356 = vmul.f32 %v2015, %v2355
      %v2357 = vsub.f32 1.0, %v2356
      %v2358 = vmul.f32 %v2355, %v2357
      %v2359 = vadd.f32 %v2355, %v2358
      %vm2360 = vweird.f32 %v2015
      %vm2361 = vweird.f32 %v2355
      %vm2362 = vmor %vm2360, %vm2361
      %v2363 = vsel %vm2362, %v2355, %v2359
      %v2364 = vand.u32 2147483647, %v2015
      %vm2365 = vcmp.eq.f32.partialorder %v2364, 8.507059e+37
      %v2366 = vand.u32 %v2015, 2147483648
      %v2367 = vor.u32 1.1754944e-38, %v2366
      %v2368 = vsel %vm2365, %v2367, %v2363
      %v2369 = vmul.f32 1.0, %v2368
      %v2370 = vrcp.pop %v2016
      %v2371 = vmul.f32 %v2016, %v2370
      %v2372 = vsub.f32 1.0, %v2371
      %v2373 = vmul.f32 %v2370, %v2372
      %v2374 = vadd.f32 %v2370, %v2373
      %vm2375 = vweird.f32 %v2016
      %vm2376 = vweird.f32 %v2370
      %vm2377 = vmor %vm2375, %vm2376
      %v2378 = vsel %vm2377, %v2370, %v2374
      %v2379 = vand.u32 2147483647, %v2016
      %vm2380 = vcmp.eq.f32.partialorder %v2379, 8.507059e+37
      %v2381 = vand.u32 %v2016, 2147483648
      %v2382 = vor.u32 1.1754944e-38, %v2381
      %v2383 = vsel %vm2380, %v2382, %v2378
      %v2384 = vmul.f32 1.0, %v2383
      %v2385 = vrcp.pop %v2017
      %v2386 = vmul.f32 %v2017, %v2385
      %v2387 = vsub.f32 1.0, %v2386
      %v2388 = vmul.f32 %v2385, %v2387
      %v2389 = vadd.f32 %v2385, %v2388
      %vm2390 = vweird.f32 %v2017
      %vm2391 = vweird.f32 %v2385
      %vm2392 = vmor %vm2390, %vm2391
      %v2393 = vsel %vm2392, %v2385, %v2389
      %v2394 = vand.u32 2147483647, %v2017
      %vm2395 = vcmp.eq.f32.partialorder %v2394, 8.507059e+37
      %v2396 = vand.u32 %v2017, 2147483648
      %v2397 = vor.u32 1.1754944e-38, %v2396
      %v2398 = vsel %vm2395, %v2397, %v2393
      %v2399 = vmul.f32 1.0, %v2398
      %v2400 = vrcp.pop %v2018
      %v2401 = vmul.f32 %v2018, %v2400
      %v2402 = vsub.f32 1.0, %v2401
      %v2403 = vmul.f32 %v2400, %v2402
      %v2404 = vadd.f32 %v2400, %v2403
      %vm2405 = vweird.f32 %v2018
      %vm2406 = vweird.f32 %v2400
      %vm2407 = vmor %vm2405, %vm2406
      %v2408 = vsel %vm2407, %v2400, %v2404
      %v2409 = vand.u32 2147483647, %v2018
      %vm2410 = vcmp.eq.f32.partialorder %v2409, 8.507059e+37
      %v2411 = vand.u32 %v2018, 2147483648
      %v2412 = vor.u32 1.1754944e-38, %v2411
      %v2413 = vsel %vm2410, %v2412, %v2408
      %v2414 = vmul.f32 1.0, %v2413
      %v2415 = vrcp.pop %v2019
      %v2416 = vmul.f32 %v2019, %v2415
      %v2417 = vsub.f32 1.0, %v2416
      %v2418 = vmul.f32 %v2415, %v2417
      %v2419 = vadd.f32 %v2415, %v2418
      %vm2420 = vweird.f32 %v2019
      %vm2421 = vweird.f32 %v2415
      %vm2422 = vmor %vm2420, %vm2421
      %v2423 = vsel %vm2422, %v2415, %v2419
      %v2424 = vand.u32 2147483647, %v2019
      %vm2425 = vcmp.eq.f32.partialorder %v2424, 8.507059e+37
      %v2426 = vand.u32 %v2019, 2147483648
      %v2427 = vor.u32 1.1754944e-38, %v2426
      %v2428 = vsel %vm2425, %v2427, %v2423
      %v2429 = vmul.f32 1.0, %v2428
      %v2430 = vrcp.pop %v2020
      %v2431 = vmul.f32 %v2020, %v2430
      %v2432 = vsub.f32 1.0, %v2431
      %v2433 = vmul.f32 %v2430, %v2432
      %v2434 = vadd.f32 %v2430, %v2433
      %vm2435 = vweird.f32 %v2020
      %vm2436 = vweird.f32 %v2430
      %vm2437 = vmor %vm2435, %vm2436
      %v2438 = vsel %vm2437, %v2430, %v2434
      %v2439 = vand.u32 2147483647, %v2020
      %vm2440 = vcmp.eq.f32.partialorder %v2439, 8.507059e+37
      %v2441 = vand.u32 %v2020, 2147483648
      %v2442 = vor.u32 1.1754944e-38, %v2441
      %v2443 = vsel %vm2440, %v2442, %v2438
      %v2444 = vmul.f32 1.0, %v2443
      %v2445 = vrcp.pop %v2021
      %v2446 = vmul.f32 %v2021, %v2445
      %v2447 = vsub.f32 1.0, %v2446
      %v2448 = vmul.f32 %v2445, %v2447
      %v2449 = vadd.f32 %v2445, %v2448
      %vm2450 = vweird.f32 %v2021
      %vm2451 = vweird.f32 %v2445
      %vm2452 = vmor %vm2450, %vm2451
      %v2453 = vsel %vm2452, %v2445, %v2449
      %v2454 = vand.u32 2147483647, %v2021
      %vm2455 = vcmp.eq.f32.partialorder %v2454, 8.507059e+37
      %v2456 = vand.u32 %v2021, 2147483648
      %v2457 = vor.u32 1.1754944e-38, %v2456
      %v2458 = vsel %vm2455, %v2457, %v2453
      %v2459 = vmul.f32 1.0, %v2458
      %v2460 = vrcp.pop %v2022
      %v2461 = vmul.f32 %v2022, %v2460
      %v2462 = vsub.f32 1.0, %v2461
      %v2463 = vmul.f32 %v2460, %v2462
      %v2464 = vadd.f32 %v2460, %v2463
      %vm2465 = vweird.f32 %v2022
      %vm2466 = vweird.f32 %v2460
      %vm2467 = vmor %vm2465, %vm2466
      %v2468 = vsel %vm2467, %v2460, %v2464
      %v2469 = vand.u32 2147483647, %v2022
      %vm2470 = vcmp.eq.f32.partialorder %v2469, 8.507059e+37
      %v2471 = vand.u32 %v2022, 2147483648
      %v2472 = vor.u32 1.1754944e-38, %v2471
      %v2473 = vsel %vm2470, %v2472, %v2468
      %v2474 = vmul.f32 1.0, %v2473
      %v2475 = vrcp.pop %v2023
      %v2476 = vmul.f32 %v2023, %v2475
      %v2477 = vsub.f32 1.0, %v2476
      %v2478 = vmul.f32 %v2475, %v2477
      %v2479 = vadd.f32 %v2475, %v2478
      %vm2480 = vweird.f32 %v2023
      %vm2481 = vweird.f32 %v2475
      %vm2482 = vmor %vm2480, %vm2481
      %v2483 = vsel %vm2482, %v2475, %v2479
      %v2484 = vand.u32 2147483647, %v2023
      %vm2485 = vcmp.eq.f32.partialorder %v2484, 8.507059e+37
      %v2486 = vand.u32 %v2023, 2147483648
      %v2487 = vor.u32 1.1754944e-38, %v2486
      %v2488 = vsel %vm2485, %v2487, %v2483
      %v2489 = vmul.f32 1.0, %v2488
      %v2490 = vrcp.pop %v2024
      %v2491 = vmul.f32 %v2024, %v2490
      %v2492 = vsub.f32 1.0, %v2491
      %v2493 = vmul.f32 %v2490, %v2492
      %v2494 = vadd.f32 %v2490, %v2493
      %vm2495 = vweird.f32 %v2024
      %vm2496 = vweird.f32 %v2490
      %vm2497 = vmor %vm2495, %vm2496
      %v2498 = vsel %vm2497, %v2490, %v2494
      %v2499 = vand.u32 2147483647, %v2024
      %vm2500 = vcmp.eq.f32.partialorder %v2499, 8.507059e+37
      %v2501 = vand.u32 %v2024, 2147483648
      %v2502 = vor.u32 1.1754944e-38, %v2501
      %v2503 = vsel %vm2500, %v2502, %v2498
      %v2504 = vmul.f32 1.0, %v2503
      %v2505 = vmul.f32 %v2039, 1.002
      %v2506 = vmul.f32 %v2054, 1.002
      %v2507 = vmul.f32 %v2069, 1.002
      %v2508 = vmul.f32 %v2084, 1.002
      %v2509 = vmul.f32 %v2099, 1.002
      %v2510 = vmul.f32 %v2114, 1.002
      %v2511 = vmul.f32 %v2129, 1.002
      %v2512 = vmul.f32 %v2144, 1.002
      %v2513 = vmul.f32 %v2159, 1.002
      %v2514 = vmul.f32 %v2174, 1.002
      %v2515 = vmul.f32 %v2189, 1.002
      %v2516 = vmul.f32 %v2204, 1.002
      %v2517 = vmul.f32 %v2219, 1.002
      %v2518 = vmul.f32 %v2234, 1.002
      %v2519 = vmul.f32 %v2249, 1.002
      %v2520 = vmul.f32 %v2264, 1.002
      %v2521 = vmul.f32 %v2279, 1.002
      %v2522 = vmul.f32 %v2294, 1.002
      %v2523 = vmul.f32 %v2309, 1.002
      %v2524 = vmul.f32 %v2324, 1.002
      %v2525 = vmul.f32 %v2339, 1.002
      %v2526 = vmul.f32 %v2354, 1.002
      %v2527 = vmul.f32 %v2369, 1.002
      %v2528 = vmul.f32 %v2384, 1.002
      %v2529 = vmul.f32 %v2399, 1.002
      %v2530 = vmul.f32 %v2414, 1.002
      %v2531 = vmul.f32 %v2429, 1.002
      %v2532 = vmul.f32 %v2444, 1.002
      %v2533 = vmul.f32 %v2459, 1.002
      %v2534 = vmul.f32 %v2474, 1.002
      %v2535 = vmul.f32 %v2489, 1.002
      %v2536 = vmul.f32 %v2504, 1.002
      %v2537 = vsub.f32 %v2505, 0.001
      %v2538 = vsub.f32 %v2506, 0.001
      %v2539 = vsub.f32 %v2507, 0.001
      %v2540 = vsub.f32 %v2508, 0.001
      %v2541 = vsub.f32 %v2509, 0.001
      %v2542 = vsub.f32 %v2510, 0.001
      %v2543 = vsub.f32 %v2511, 0.001
      %v2544 = vsub.f32 %v2512, 0.001
      %v2545 = vsub.f32 %v2513, 0.001
      %v2546 = vsub.f32 %v2514, 0.001
      %v2547 = vsub.f32 %v2515, 0.001
      %v2548 = vsub.f32 %v2516, 0.001
      %v2549 = vsub.f32 %v2517, 0.001
      %v2550 = vsub.f32 %v2518, 0.001
      %v2551 = vsub.f32 %v2519, 0.001
      %v2552 = vsub.f32 %v2520, 0.001
      %v2553 = vsub.f32 %v2521, 0.001
      %v2554 = vsub.f32 %v2522, 0.001
      %v2555 = vsub.f32 %v2523, 0.001
      %v2556 = vsub.f32 %v2524, 0.001
      %v2557 = vsub.f32 %v2525, 0.001
      %v2558 = vsub.f32 %v2526, 0.001
      %v2559 = vsub.f32 %v2527, 0.001
      %v2560 = vsub.f32 %v2528, 0.001
      %v2561 = vsub.f32 %v2529, 0.001
      %v2562 = vsub.f32 %v2530, 0.001
      %v2563 = vsub.f32 %v2531, 0.001
      %v2564 = vsub.f32 %v2532, 0.001
      %v2565 = vsub.f32 %v2533, 0.001
      %v2566 = vsub.f32 %v2534, 0.001
      %v2567 = vsub.f32 %v2535, 0.001
      %v2568 = vsub.f32 %v2536, 0.001
      %v2569 = vlaneseq
      %v2570 = vand.u32 %v2569, 127
      %vm2571 = vcmp.eq.s32.totalorder %v2570, 0
      %v2572 = vsel %vm2571, %v1802, %v2537
      %v2573 = vsel %vm2571, %v1805, %v2538
      %v2574 = vsel %vm2571, %v1808, %v2539
      %v2575 = vsel %vm2571, %v1811, %v2540
      %v2576 = vsel %vm2571, %v1814, %v2541
      %v2577 = vsel %vm2571, %v1817, %v2542
      %v2578 = vsel %vm2571, %v1820, %v2543
      %v2579 = vsel %vm2571, %v1823, %v2544
      %v2580 = vsel %vm2571, %v1826, %v2545
      %v2581 = vsel %vm2571, %v1829, %v2546
      %v2582 = vsel %vm2571, %v1832, %v2547
      %v2583 = vsel %vm2571, %v1835, %v2548
      %v2584 = vsel %vm2571, %v1838, %v2549
      %v2585 = vsel %vm2571, %v1841, %v2550
      %v2586 = vsel %vm2571, %v1844, %v2551
      %v2587 = vsel %vm2571, %v1847, %v2552
      %v2588 = vsel %vm2571, %v1850, %v2553
      %v2589 = vsel %vm2571, %v1853, %v2554
      %v2590 = vsel %vm2571, %v1856, %v2555
      %v2591 = vsel %vm2571, %v1859, %v2556
      %v2592 = vsel %vm2571, %v1862, %v2557
      %v2593 = vsel %vm2571, %v1865, %v2558
      %v2594 = vsel %vm2571, %v1868, %v2559
      %v2595 = vsel %vm2571, %v1871, %v2560
      %v2596 = vsel %vm2571, %v1874, %v2561
      %v2597 = vsel %vm2571, %v1877, %v2562
      %v2598 = vsel %vm2571, %v1880, %v2563
      %v2599 = vsel %vm2571, %v1883, %v2564
      %v2600 = vsel %vm2571, %v1886, %v2565
      %v2601 = vsel %vm2571, %v1889, %v2566
      %v2602 = vsel %vm2571, %v1892, %v2567
      %v2603 = vsel %vm2571, %v1895, %v2568
      %vm2604 = vcmask 269312
      %2605 = vst.msk [vmem:[%s262] sm:$0xff] %vm2604, %v2572
      %2606 = vst.msk [vmem:[%s262 + $0x8] sm:$0xff] %vm2604, %v2573
      %2607 = vst.msk [vmem:[%s262 + $0x10] sm:$0xff] %vm2604, %v2574
      %2608 = vst.msk [vmem:[%s262 + $0x18] sm:$0xff] %vm2604, %v2575
      %2609 = vst.msk [vmem:[%s262 + $0x20] sm:$0xff] %vm2604, %v2576
      %2610 = vst.msk [vmem:[%s262 + $0x28] sm:$0xff] %vm2604, %v2577
      %2611 = vst.msk [vmem:[%s262 + $0x30] sm:$0xff] %vm2604, %v2578
      %2612 = vst.msk [vmem:[%s262 + $0x38] sm:$0xff] %vm2604, %v2579
      %2613 = vst.msk [vmem:[%s262 + $0x40] sm:$0xff] %vm2604, %v2580
      %2614 = vst.msk [vmem:[%s262 + $0x48] sm:$0xff] %vm2604, %v2581
      %2615 = vst.msk [vmem:[%s262 + $0x50] sm:$0xff] %vm2604, %v2582
      %2616 = vst.msk [vmem:[%s262 + $0x58] sm:$0xff] %vm2604, %v2583
      %2617 = vst.msk [vmem:[%s262 + $0x60] sm:$0xff] %vm2604, %v2584
      %2618 = vst.msk [vmem:[%s262 + $0x68] sm:$0xff] %vm2604, %v2585
      %2619 = vst.msk [vmem:[%s262 + $0x70] sm:$0xff] %vm2604, %v2586
      %2620 = vst.msk [vmem:[%s262 + $0x78] sm:$0xff] %vm2604, %v2587
      %2621 = vst.msk [vmem:[%s262 + $0x80] sm:$0xff] %vm2604, %v2588
      %2622 = vst.msk [vmem:[%s262 + $0x88] sm:$0xff] %vm2604, %v2589
      %2623 = vst.msk [vmem:[%s262 + $0x90] sm:$0xff] %vm2604, %v2590
      %2624 = vst.msk [vmem:[%s262 + $0x98] sm:$0xff] %vm2604, %v2591
      %2625 = vst.msk [vmem:[%s262 + $0xa0] sm:$0xff] %vm2604, %v2592
      %2626 = vst.msk [vmem:[%s262 + $0xa8] sm:$0xff] %vm2604, %v2593
      %2627 = vst.msk [vmem:[%s262 + $0xb0] sm:$0xff] %vm2604, %v2594
      %2628 = vst.msk [vmem:[%s262 + $0xb8] sm:$0xff] %vm2604, %v2595
      %2629 = vst.msk [vmem:[%s262 + $0xc0] sm:$0xff] %vm2604, %v2596
      %2630 = vst.msk [vmem:[%s262 + $0xc8] sm:$0xff] %vm2604, %v2597
      %2631 = vst.msk [vmem:[%s262 + $0xd0] sm:$0xff] %vm2604, %v2598
      %2632 = vst.msk [vmem:[%s262 + $0xd8] sm:$0xff] %vm2604, %v2599
      %2633 = vst.msk [vmem:[%s262 + $0xe0] sm:$0xff] %vm2604, %v2600
      %2634 = vst.msk [vmem:[%s262 + $0xe8] sm:$0xff] %vm2604, %v2601
      %2635 = vst.msk [vmem:[%s262 + $0xf0] sm:$0xff] %vm2604, %v2602
      %2636 = vst.msk [vmem:[%s262 + $0xf8] sm:$0xff] %vm2604, %v2603
      %s2637 = smul.u32 32, %s21
      %p2638 = scmp.lt.s32.totalorder %s20, 1
      %s2639 = scalar_select %p2638, %s20, 1
      %p2640 = scmp.lt.s32.totalorder %s2637, 31
      %s2641 = scalar_select %p2640, %s2637, 31
      %s2642 = smul.addr %s2639, 32
      %s2643 = sadd.s32 %s2641, %s2642
      %s2644 = smul.addr %s2643, 8
      %s2645 = scalar_lea.vmem %s5, %s2644
      // Predicated region
      $region41: #{osg_decoder_pallas.1} parent=39 // pred_check
        %p2646 = pneg %p160
      $region42: #{osg_decoder_pallas.1} parent=39 // pred_check_branch
        %2648 = sbr.rel (%p2646) target = $region44
      $region43: #{osg_decoder_pallas.1} parent=39 // pred_region
        %s2649 = smul.u32 32, %s21
      $region44: #{osg_decoder_pallas.1} parent=39 // pred_fallthru
        _
    $region40: #{osg_decoder_pallas.1} parent=5 // pred_fallthru
      _
    %p2650 = scmp.le.s32.totalorder 2, %s11
    // Predicated region
    $region45: #{osg_decoder_pallas.1} parent=5 // pred_check
      %p2651 = pneg %p2650
    $region46: #{osg_decoder_pallas.1} parent=5 // pred_check_branch
      %2653 = sbr.rel (%p2651) target = $region48
    $region47: #{osg_decoder_pallas.1} parent=5 // pred_region
      %s2654 = ssub.s32 %s11, 2
      // Predicated region
      $region49: #{osg_decoder_pallas.1} parent=47 // pred_check
        %p2655 = pneg %p166
      $region50: #{osg_decoder_pallas.1} parent=47 // pred_check_branch
        %2657 = sbr.rel (%p2655) target = $region52
      $region51: #{osg_decoder_pallas.1} parent=47 // pred_region
        %s2658 = smul.u32 32, %s23
        %p2659 = scmp.lt.s32.totalorder %s22, 1
        %s2660 = scalar_select %p2659, %s22, 1
        %p2661 = scmp.lt.s32.totalorder %s2658, 31
        %s2662 = scalar_select %p2661, %s2658, 31
        %s2663 = smul.addr %s2660, 32
        %s2664 = sadd.s32 %s2662, %s2663
        %s2665 = smul.addr %s2664, 8
        %s2666 = scalar_lea.vmem %s5, %s2665
      $region52: #{osg_decoder_pallas.1} parent=47 // pred_fallthru
        _
    $region48: #{osg_decoder_pallas.1} parent=5 // pred_fallthru
      _
  $region6: #{osg_decoder_pallas.1} parent=0 // loop_footer
    %s15 = sadd.s32 1, %s11
  $region7: #{osg_decoder_pallas.1} parent=0 // loop_footer_branch
    %10 = sbr.rel target = $region3
  $region8: #{osg_decoder_pallas.1} parent=0 // loop_exit
    _

</llo_original>
